<compile_context>
chip_gen: v5e
topology: v5e:2x2
jax: 0.10.0
libtpu: 0.0.40
codegen_flags: <defaults>
</compile_context>

<pallas_src>
import jax
import jax.numpy as jnp
from jax.experimental import pallas as pl
from jax.experimental.pallas import tpu as pltpu

IN_DIM = 128
HID_DIM = 64
OUT_CH = 22
TOP_N = 8


def channel_select_kernel(x_ref, w1_ref, b1_ref, w2_ref, b2_ref, o_ref):
    # x_ref: (1, ts, 128)  w1_ref: (128, 64)  b1_ref: (1, 64)
    # w2_ref: (64, 22)     b2_ref: (1, 22)    o_ref: (1, 22, ts)
    x = x_ref[0]                                            # (ts, 128)

    # l1 + ReLU  (MXU matmul, f32 accumulate)
    h = jnp.dot(x, w1_ref[...], preferred_element_type=jnp.float32) + b1_ref[...]
    h = jnp.maximum(h, 0.0)                                 # (ts, 64)

    # l2 + ReLU
    y = jnp.dot(h, w2_ref[...], preferred_element_type=jnp.float32) + b2_ref[...]
    y = jnp.maximum(y, 0.0)                                 # (ts, 22)

    # Fused permute(0, 2, 1): switch to channel-major layout now.  The small (ts,22)
    # -> (22,ts) transpose rides the otherwise-idle XLU slot and makes the output store
    # lane-dense (last dim = ts, a multiple of 128) instead of masked 22-wide stores
    # plus an extra HBM transpose pass in the wrapper.
    y_t = y.T                                               # (22, ts)

    # Top-8-of-22 along the channel axis (== torch.topk(dim=1) + scatter of the values).
    # rank[c] = #channels that beat channel c; channel j beats channel i iff y_j > y_i,
    # or y_j == y_i with j < i (lower-index tie-break, matching lax.top_k / torch.topk).
    # 22-step accumulation on (22, ts) vregs -- pure VPU work, no 3-D temporaries.
    ch_idx = jax.lax.broadcasted_iota(jnp.int32, (OUT_CH, 1), 0)   # hoisted out of loop
    rank = jnp.zeros(y_t.shape, dtype=jnp.float32)
    for j in range(OUT_CH):                                 # static unroll, 22 steps
        yj = y_t[j:j + 1, :]                                # (1, ts)
        beats = (yj > y_t) | ((yj == y_t) & (ch_idx > j))
        rank = rank + beats.astype(jnp.float32)

    o_ref[0] = jnp.where(rank < float(TOP_N), y_t, 0.0).astype(o_ref.dtype)


def channel_select(x, w1t, b1, w2t, b2, *, ts=512):
    """x: (B, S, 128) float32 -> (B, 22, S) float32  (== Channel_select.forward)."""
    B, S, D = x.shape
    assert D == IN_DIM

    # Lane-dense sequence tile: multiple of 128, capped by the (padded) sequence length.
    ts = max(128, (ts // 128) * 128)
    ts = min(ts, 128 * pl.cdiv(S, 128))
    s_pad = ts * pl.cdiv(S, ts)
    if s_pad != S:
        x = jnp.pad(x, ((0, 0), (0, s_pad - S), (0, 0)))    # padded rows sliced off below

    b1r = b1.reshape(1, HID_DIM)
    b2r = b2.reshape(1, OUT_CH)

    out = pl.pallas_call(
        channel_select_kernel,
        out_shape=jax.ShapeDtypeStruct((B, OUT_CH, s_pad), jnp.float32),
        grid_spec=pltpu.PrefetchScalarGridSpec(
            num_scalar_prefetch=0,
            grid=(B, s_pad // ts),
            in_specs=[
                pl.BlockSpec((1, ts, IN_DIM), lambda b, s: (b, s, 0)),
                # weights/biases: constant index maps -> stay VMEM-resident across the grid
                pl.BlockSpec((IN_DIM, HID_DIM), lambda b, s: (0, 0)),
                pl.BlockSpec((1, HID_DIM), lambda b, s: (0, 0)),
                pl.BlockSpec((HID_DIM, OUT_CH), lambda b, s: (0, 0)),
                pl.BlockSpec((1, OUT_CH), lambda b, s: (0, 0)),
            ],
            out_specs=pl.BlockSpec((1, OUT_CH, ts), lambda b, s: (b, 0, s)),
        ),
        compiler_params=pltpu.CompilerParams(
            dimension_semantics=("parallel", "parallel"),
        ),
    )(x, w1t, b1r, w2t, b2r)

    return out[:, :, :S]


def _reference(x, w1t, b1, w2t, b2):
    """Pure-JAX reference mirroring the PyTorch forward."""
    h = jnp.maximum(x @ w1t + b1, 0.0)
    y = jnp.maximum(h @ w2t + b2, 0.0)          # (B, S, 22)
    y = jnp.transpose(y, (0, 2, 1))             # (B, 22, S)
    # topk(dim=1) + scatter of the values == zero out everything below rank TOP_N
    _, ind = jax.lax.top_k(jnp.transpose(y, (0, 2, 1)), TOP_N)    # (B, S, TOP_N)
    mask = jnp.zeros_like(y, dtype=bool)
    mask = mask.at[
        jnp.arange(y.shape[0])[:, None, None],
        jnp.transpose(ind, (0, 2, 1)),
        jnp.arange(y.shape[2])[None, None, :],
    ].set(True)
    return jnp.where(mask, y, 0.0)


if __name__ == "__main__":
    key = jax.random.PRNGKey(0)
    k_x, k_w1, k_b1, k_w2, k_b2 = jax.random.split(key, 5)

    # Deterministic parameters (shapes from nn.Linear(128,64) / nn.Linear(64,22)),
    # stored pre-transposed so the kernel does x @ W^T directly.
    w1t = jax.random.normal(k_w1, (IN_DIM, HID_DIM), dtype=jnp.float32) * 0.05
    b1 = jax.random.normal(k_b1, (HID_DIM,), dtype=jnp.float32) * 0.05
    w2t = jax.random.normal(k_w2, (HID_DIM, OUT_CH), dtype=jnp.float32) * 0.05
    b2 = jax.random.normal(k_b2, (OUT_CH,), dtype=jnp.float32) * 0.05

    # Primary small test (B=2, S=8) plus a padding / multi-tile test (S=600 -> S_pad=1024, 2 tiles).
    for (B, S) in [(2, 8), (2, 600)]:
        kx = jax.random.fold_in(k_x, S)
        x = jax.random.normal(kx, (B, S, IN_DIM), dtype=jnp.float32)

        out = jax.block_until_ready(channel_select(x, w1t, b1, w2t, b2))
        ref = _reference(x, w1t, b1, w2t, b2)

        assert out.shape == (B, OUT_CH, S), out.shape
        assert jnp.allclose(out, ref, atol=1e-5, rtol=1e-5), f"mismatch vs reference at (B,S)=({B},{S})"

    print("KERNEL_OK")
</pallas_src>

<mosaic_0001>
module attributes {stable_mosaic.version = 11 : i64} {
  func.func @channel_select_kernel(%arg0: i32, %arg1: i32, %arg2: memref<1x128x128xf32, #tpu.memory_space<vmem>>, %arg3: memref<128x64xf32, #tpu.memory_space<vmem>>, %arg4: memref<1x64xf32, #tpu.memory_space<vmem>>, %arg5: memref<64x22xf32, #tpu.memory_space<vmem>>, %arg6: memref<1x22xf32, #tpu.memory_space<vmem>>, %arg7: memref<1x22x128xf32, #tpu.memory_space<vmem>>) attributes {dimension_semantics = [#tpu.dimension_semantics<parallel>, #tpu.dimension_semantics<parallel>], iteration_bounds = array<i64: 2, 1>, scalar_prefetch = 0 : i64, scratch_operands = 0 : i64, tpu.core_type = #tpu.core_type<tc>, window_params = [{transform_indices = @transform_0, window_bounds = array<i64: 1, 128, 128>}, {pipeline_mode = #tpu.pipeline_mode<synchronous>, transform_indices = @transform_1, window_bounds = array<i64: 128, 64>}, {pipeline_mode = #tpu.pipeline_mode<synchronous>, transform_indices = @transform_2, window_bounds = array<i64: 1, 64>}, {pipeline_mode = #tpu.pipeline_mode<synchronous>, transform_indices = @transform_3, window_bounds = array<i64: 64, 22>}, {pipeline_mode = #tpu.pipeline_mode<synchronous>, transform_indices = @transform_4, window_bounds = array<i64: 1, 22>}, {transform_indices = @transform_5, window_bounds = array<i64: 1, 22, 128>}]} {
    %c0 = arith.constant 0 : index
    %c0_0 = arith.constant 0 : index
    %c0_1 = arith.constant 0 : index
    %0 = vector.load %arg2[%c0, %c0_0, %c0_1] : memref<1x128x128xf32, #tpu.memory_space<vmem>>, vector<1x128x128xf32>
    %1 = vector.shape_cast %0 : vector<1x128x128xf32> to vector<128x128xf32>
    %c0_2 = arith.constant 0 : index
    %c0_3 = arith.constant 0 : index
    %2 = vector.load %arg3[%c0_2, %c0_3] : memref<128x64xf32, #tpu.memory_space<vmem>>, vector<128x64xf32>
    %cst = arith.constant dense<0.000000e+00> : vector<128x64xf32>
    %3 = tpu.matmul %1, %2, %cst {dimension_numbers = #tpu.dot_dimension_numbers<[1], [0], [0], [1], [0, 0, 1, 1], [], []>} : vector<128x128xf32>, vector<128x64xf32>, vector<128x64xf32> -> vector<128x64xf32>
    %c0_4 = arith.constant 0 : index
    %c0_5 = arith.constant 0 : index
    %4 = vector.load %arg4[%c0_4, %c0_5] : memref<1x64xf32, #tpu.memory_space<vmem>>, vector<1x64xf32>
    %5 = vector.broadcast %4 : vector<1x64xf32> to vector<128x64xf32>
    %6 = arith.addf %3, %5 : vector<128x64xf32>
    %cst_6 = arith.constant 0.000000e+00 : f32
    %7 = vector.broadcast %cst_6 : f32 to vector<128x64xf32>
    %8 = arith.maximumf %6, %7 : vector<128x64xf32>
    %c0_7 = arith.constant 0 : index
    %c0_8 = arith.constant 0 : index
    %9 = vector.load %arg5[%c0_7, %c0_8] : memref<64x22xf32, #tpu.memory_space<vmem>>, vector<64x22xf32>
    %cst_9 = arith.constant dense<0.000000e+00> : vector<128x22xf32>
    %10 = tpu.matmul %8, %9, %cst_9 {dimension_numbers = #tpu.dot_dimension_numbers<[1], [0], [0], [1], [0, 0, 1, 1], [], []>} : vector<128x64xf32>, vector<64x22xf32>, vector<128x22xf32> -> vector<128x22xf32>
    %c0_10 = arith.constant 0 : index
    %c0_11 = arith.constant 0 : index
    %11 = vector.load %arg6[%c0_10, %c0_11] : memref<1x22xf32, #tpu.memory_space<vmem>>, vector<1x22xf32>
    %12 = vector.broadcast %11 : vector<1x22xf32> to vector<128x22xf32>
    %13 = arith.addf %10, %12 : vector<128x22xf32>
    %cst_12 = arith.constant 0.000000e+00 : f32
    %14 = vector.broadcast %cst_12 : f32 to vector<128x22xf32>
    %15 = arith.maximumf %13, %14 : vector<128x22xf32>
    %16 = tpu.transpose %15, [1, 0] : vector<128x22xf32> -> vector<22x128xf32>
    %17 = tpu.iota {dimensions = array<i32: 0>} : vector<22x1xi32>
    %cst_13 = arith.constant 0.000000e+00 : f32
    %18 = vector.broadcast %cst_13 : f32 to vector<22x128xf32>
    %19 = vector.extract_strided_slice %16 {offsets = [0, 0], sizes = [1, 128], strides = [1, 1]} : vector<22x128xf32> to vector<1x128xf32>
    %20 = vector.broadcast %19 : vector<1x128xf32> to vector<22x128xf32>
    %21 = arith.cmpf ogt, %20, %16 : vector<22x128xf32>
    %22 = vector.broadcast %19 : vector<1x128xf32> to vector<22x128xf32>
    %23 = arith.cmpf oeq, %22, %16 : vector<22x128xf32>
    %c0_i32 = arith.constant 0 : i32
    %24 = vector.broadcast %c0_i32 : i32 to vector<22x1xi32>
    %25 = arith.cmpi sgt, %17, %24 : vector<22x1xi32>
    %26 = vector.broadcast %25 : vector<22x1xi1> to vector<22x128xi1>
    %27 = arith.andi %23, %26 : vector<22x128xi1>
    %28 = arith.ori %21, %27 : vector<22x128xi1>
    %29 = arith.extui %28 : vector<22x128xi1> to vector<22x128xi32>
    %30 = arith.sitofp %29 : vector<22x128xi32> to vector<22x128xf32>
    %31 = arith.addf %18, %30 : vector<22x128xf32>
    %32 = vector.extract_strided_slice %16 {offsets = [1, 0], sizes = [1, 128], strides = [1, 1]} : vector<22x128xf32> to vector<1x128xf32>
    %33 = vector.broadcast %32 : vector<1x128xf32> to vector<22x128xf32>
    %34 = arith.cmpf ogt, %33, %16 : vector<22x128xf32>
    %35 = vector.broadcast %32 : vector<1x128xf32> to vector<22x128xf32>
    %36 = arith.cmpf oeq, %35, %16 : vector<22x128xf32>
    %c1_i32 = arith.constant 1 : i32
    %37 = vector.broadcast %c1_i32 : i32 to vector<22x1xi32>
    %38 = arith.cmpi sgt, %17, %37 : vector<22x1xi32>
    %39 = vector.broadcast %38 : vector<22x1xi1> to vector<22x128xi1>
    %40 = arith.andi %36, %39 : vector<22x128xi1>
    %41 = arith.ori %34, %40 : vector<22x128xi1>
    %42 = arith.extui %41 : vector<22x128xi1> to vector<22x128xi32>
    %43 = arith.sitofp %42 : vector<22x128xi32> to vector<22x128xf32>
    %44 = arith.addf %31, %43 : vector<22x128xf32>
    %45 = vector.extract_strided_slice %16 {offsets = [2, 0], sizes = [1, 128], strides = [1, 1]} : vector<22x128xf32> to vector<1x128xf32>
    %46 = vector.broadcast %45 : vector<1x128xf32> to vector<22x128xf32>
    %47 = arith.cmpf ogt, %46, %16 : vector<22x128xf32>
    %48 = vector.broadcast %45 : vector<1x128xf32> to vector<22x128xf32>
    %49 = arith.cmpf oeq, %48, %16 : vector<22x128xf32>
    %c2_i32 = arith.constant 2 : i32
    %50 = vector.broadcast %c2_i32 : i32 to vector<22x1xi32>
    %51 = arith.cmpi sgt, %17, %50 : vector<22x1xi32>
    %52 = vector.broadcast %51 : vector<22x1xi1> to vector<22x128xi1>
    %53 = arith.andi %49, %52 : vector<22x128xi1>
    %54 = arith.ori %47, %53 : vector<22x128xi1>
    %55 = arith.extui %54 : vector<22x128xi1> to vector<22x128xi32>
    %56 = arith.sitofp %55 : vector<22x128xi32> to vector<22x128xf32>
    %57 = arith.addf %44, %56 : vector<22x128xf32>
    %58 = vector.extract_strided_slice %16 {offsets = [3, 0], sizes = [1, 128], strides = [1, 1]} : vector<22x128xf32> to vector<1x128xf32>
    %59 = vector.broadcast %58 : vector<1x128xf32> to vector<22x128xf32>
    %60 = arith.cmpf ogt, %59, %16 : vector<22x128xf32>
    %61 = vector.broadcast %58 : vector<1x128xf32> to vector<22x128xf32>
    %62 = arith.cmpf oeq, %61, %16 : vector<22x128xf32>
    %c3_i32 = arith.constant 3 : i32
    %63 = vector.broadcast %c3_i32 : i32 to vector<22x1xi32>
    %64 = arith.cmpi sgt, %17, %63 : vector<22x1xi32>
    %65 = vector.broadcast %64 : vector<22x1xi1> to vector<22x128xi1>
    %66 = arith.andi %62, %65 : vector<22x128xi1>
    %67 = arith.ori %60, %66 : vector<22x128xi1>
    %68 = arith.extui %67 : vector<22x128xi1> to vector<22x128xi32>
    %69 = arith.sitofp %68 : vector<22x128xi32> to vector<22x128xf32>
    %70 = arith.addf %57, %69 : vector<22x128xf32>
    %71 = vector.extract_strided_slice %16 {offsets = [4, 0], sizes = [1, 128], strides = [1, 1]} : vector<22x128xf32> to vector<1x128xf32>
    %72 = vector.broadcast %71 : vector<1x128xf32> to vector<22x128xf32>
    %73 = arith.cmpf ogt, %72, %16 : vector<22x128xf32>
    %74 = vector.broadcast %71 : vector<1x128xf32> to vector<22x128xf32>
    %75 = arith.cmpf oeq, %74, %16 : vector<22x128xf32>
    %c4_i32 = arith.constant 4 : i32
    %76 = vector.broadcast %c4_i32 : i32 to vector<22x1xi32>
    %77 = arith.cmpi sgt, %17, %76 : vector<22x1xi32>
    %78 = vector.broadcast %77 : vector<22x1xi1> to vector<22x128xi1>
    %79 = arith.andi %75, %78 : vector<22x128xi1>
    %80 = arith.ori %73, %79 : vector<22x128xi1>
    %81 = arith.extui %80 : vector<22x128xi1> to vector<22x128xi32>
    %82 = arith.sitofp %81 : vector<22x128xi32> to vector<22x128xf32>
    %83 = arith.addf %70, %82 : vector<22x128xf32>
    %84 = vector.extract_strided_slice %16 {offsets = [5, 0], sizes = [1, 128], strides = [1, 1]} : vector<22x128xf32> to vector<1x128xf32>
    %85 = vector.broadcast %84 : vector<1x128xf32> to vector<22x128xf32>
    %86 = arith.cmpf ogt, %85, %16 : vector<22x128xf32>
    %87 = vector.broadcast %84 : vector<1x128xf32> to vector<22x128xf32>
    %88 = arith.cmpf oeq, %87, %16 : vector<22x128xf32>
    %c5_i32 = arith.constant 5 : i32
    %89 = vector.broadcast %c5_i32 : i32 to vector<22x1xi32>
    %90 = arith.cmpi sgt, %17, %89 : vector<22x1xi32>
    %91 = vector.broadcast %90 : vector<22x1xi1> to vector<22x128xi1>
    %92 = arith.andi %88, %91 : vector<22x128xi1>
    %93 = arith.ori %86, %92 : vector<22x128xi1>
    %94 = arith.extui %93 : vector<22x128xi1> to vector<22x128xi32>
    %95 = arith.sitofp %94 : vector<22x128xi32> to vector<22x128xf32>
    %96 = arith.addf %83, %95 : vector<22x128xf32>
    %97 = vector.extract_strided_slice %16 {offsets = [6, 0], sizes = [1, 128], strides = [1, 1]} : vector<22x128xf32> to vector<1x128xf32>
    %98 = vector.broadcast %97 : vector<1x128xf32> to vector<22x128xf32>
    %99 = arith.cmpf ogt, %98, %16 : vector<22x128xf32>
    %100 = vector.broadcast %97 : vector<1x128xf32> to vector<22x128xf32>
    %101 = arith.cmpf oeq, %100, %16 : vector<22x128xf32>
    %c6_i32 = arith.constant 6 : i32
    %102 = vector.broadcast %c6_i32 : i32 to vector<22x1xi32>
    %103 = arith.cmpi sgt, %17, %102 : vector<22x1xi32>
    %104 = vector.broadcast %103 : vector<22x1xi1> to vector<22x128xi1>
    %105 = arith.andi %101, %104 : vector<22x128xi1>
    %106 = arith.ori %99, %105 : vector<22x128xi1>
    %107 = arith.extui %106 : vector<22x128xi1> to vector<22x128xi32>
    %108 = arith.sitofp %107 : vector<22x128xi32> to vector<22x128xf32>
    %109 = arith.addf %96, %108 : vector<22x128xf32>
    %110 = vector.extract_strided_slice %16 {offsets = [7, 0], sizes = [1, 128], strides = [1, 1]} : vector<22x128xf32> to vector<1x128xf32>
    %111 = vector.broadcast %110 : vector<1x128xf32> to vector<22x128xf32>
    %112 = arith.cmpf ogt, %111, %16 : vector<22x128xf32>
    %113 = vector.broadcast %110 : vector<1x128xf32> to vector<22x128xf32>
    %114 = arith.cmpf oeq, %113, %16 : vector<22x128xf32>
    %c7_i32 = arith.constant 7 : i32
    %115 = vector.broadcast %c7_i32 : i32 to vector<22x1xi32>
    %116 = arith.cmpi sgt, %17, %115 : vector<22x1xi32>
    %117 = vector.broadcast %116 : vector<22x1xi1> to vector<22x128xi1>
    %118 = arith.andi %114, %117 : vector<22x128xi1>
    %119 = arith.ori %112, %118 : vector<22x128xi1>
    %120 = arith.extui %119 : vector<22x128xi1> to vector<22x128xi32>
    %121 = arith.sitofp %120 : vector<22x128xi32> to vector<22x128xf32>
    %122 = arith.addf %109, %121 : vector<22x128xf32>
    %123 = vector.extract_strided_slice %16 {offsets = [8, 0], sizes = [1, 128], strides = [1, 1]} : vector<22x128xf32> to vector<1x128xf32>
    %124 = vector.broadcast %123 : vector<1x128xf32> to vector<22x128xf32>
    %125 = arith.cmpf ogt, %124, %16 : vector<22x128xf32>
    %126 = vector.broadcast %123 : vector<1x128xf32> to vector<22x128xf32>
    %127 = arith.cmpf oeq, %126, %16 : vector<22x128xf32>
    %c8_i32 = arith.constant 8 : i32
    %128 = vector.broadcast %c8_i32 : i32 to vector<22x1xi32>
    %129 = arith.cmpi sgt, %17, %128 : vector<22x1xi32>
    %130 = vector.broadcast %129 : vector<22x1xi1> to vector<22x128xi1>
    %131 = arith.andi %127, %130 : vector<22x128xi1>
    %132 = arith.ori %125, %131 : vector<22x128xi1>
    %133 = arith.extui %132 : vector<22x128xi1> to vector<22x128xi32>
    %134 = arith.sitofp %133 : vector<22x128xi32> to vector<22x128xf32>
    %135 = arith.addf %122, %134 : vector<22x128xf32>
    %136 = vector.extract_strided_slice %16 {offsets = [9, 0], sizes = [1, 128], strides = [1, 1]} : vector<22x128xf32> to vector<1x128xf32>
    %137 = vector.broadcast %136 : vector<1x128xf32> to vector<22x128xf32>
    %138 = arith.cmpf ogt, %137, %16 : vector<22x128xf32>
    %139 = vector.broadcast %136 : vector<1x128xf32> to vector<22x128xf32>
    %140 = arith.cmpf oeq, %139, %16 : vector<22x128xf32>
    %c9_i32 = arith.constant 9 : i32
    %141 = vector.broadcast %c9_i32 : i32 to vector<22x1xi32>
    %142 = arith.cmpi sgt, %17, %141 : vector<22x1xi32>
    %143 = vector.broadcast %142 : vector<22x1xi1> to vector<22x128xi1>
    %144 = arith.andi %140, %143 : vector<22x128xi1>
    %145 = arith.ori %138, %144 : vector<22x128xi1>
    %146 = arith.extui %145 : vector<22x128xi1> to vector<22x128xi32>
    %147 = arith.sitofp %146 : vector<22x128xi32> to vector<22x128xf32>
    %148 = arith.addf %135, %147 : vector<22x128xf32>
    %149 = vector.extract_strided_slice %16 {offsets = [10, 0], sizes = [1, 128], strides = [1, 1]} : vector<22x128xf32> to vector<1x128xf32>
    %150 = vector.broadcast %149 : vector<1x128xf32> to vector<22x128xf32>
    %151 = arith.cmpf ogt, %150, %16 : vector<22x128xf32>
    %152 = vector.broadcast %149 : vector<1x128xf32> to vector<22x128xf32>
    %153 = arith.cmpf oeq, %152, %16 : vector<22x128xf32>
    %c10_i32 = arith.constant 10 : i32
    %154 = vector.broadcast %c10_i32 : i32 to vector<22x1xi32>
    %155 = arith.cmpi sgt, %17, %154 : vector<22x1xi32>
    %156 = vector.broadcast %155 : vector<22x1xi1> to vector<22x128xi1>
    %157 = arith.andi %153, %156 : vector<22x128xi1>
    %158 = arith.ori %151, %157 : vector<22x128xi1>
    %159 = arith.extui %158 : vector<22x128xi1> to vector<22x128xi32>
    %160 = arith.sitofp %159 : vector<22x128xi32> to vector<22x128xf32>
    %161 = arith.addf %148, %160 : vector<22x128xf32>
    %162 = vector.extract_strided_slice %16 {offsets = [11, 0], sizes = [1, 128], strides = [1, 1]} : vector<22x128xf32> to vector<1x128xf32>
    %163 = vector.broadcast %162 : vector<1x128xf32> to vector<22x128xf32>
    %164 = arith.cmpf ogt, %163, %16 : vector<22x128xf32>
    %165 = vector.broadcast %162 : vector<1x128xf32> to vector<22x128xf32>
    %166 = arith.cmpf oeq, %165, %16 : vector<22x128xf32>
    %c11_i32 = arith.constant 11 : i32
    %167 = vector.broadcast %c11_i32 : i32 to vector<22x1xi32>
    %168 = arith.cmpi sgt, %17, %167 : vector<22x1xi32>
    %169 = vector.broadcast %168 : vector<22x1xi1> to vector<22x128xi1>
    %170 = arith.andi %166, %169 : vector<22x128xi1>
    %171 = arith.ori %164, %170 : vector<22x128xi1>
    %172 = arith.extui %171 : vector<22x128xi1> to vector<22x128xi32>
    %173 = arith.sitofp %172 : vector<22x128xi32> to vector<22x128xf32>
    %174 = arith.addf %161, %173 : vector<22x128xf32>
    %175 = vector.extract_strided_slice %16 {offsets = [12, 0], sizes = [1, 128], strides = [1, 1]} : vector<22x128xf32> to vector<1x128xf32>
    %176 = vector.broadcast %175 : vector<1x128xf32> to vector<22x128xf32>
    %177 = arith.cmpf ogt, %176, %16 : vector<22x128xf32>
    %178 = vector.broadcast %175 : vector<1x128xf32> to vector<22x128xf32>
    %179 = arith.cmpf oeq, %178, %16 : vector<22x128xf32>
    %c12_i32 = arith.constant 12 : i32
    %180 = vector.broadcast %c12_i32 : i32 to vector<22x1xi32>
    %181 = arith.cmpi sgt, %17, %180 : vector<22x1xi32>
    %182 = vector.broadcast %181 : vector<22x1xi1> to vector<22x128xi1>
    %183 = arith.andi %179, %182 : vector<22x128xi1>
    %184 = arith.ori %177, %183 : vector<22x128xi1>
    %185 = arith.extui %184 : vector<22x128xi1> to vector<22x128xi32>
    %186 = arith.sitofp %185 : vector<22x128xi32> to vector<22x128xf32>
    %187 = arith.addf %174, %186 : vector<22x128xf32>
    %188 = vector.extract_strided_slice %16 {offsets = [13, 0], sizes = [1, 128], strides = [1, 1]} : vector<22x128xf32> to vector<1x128xf32>
    %189 = vector.broadcast %188 : vector<1x128xf32> to vector<22x128xf32>
    %190 = arith.cmpf ogt, %189, %16 : vector<22x128xf32>
    %191 = vector.broadcast %188 : vector<1x128xf32> to vector<22x128xf32>
    %192 = arith.cmpf oeq, %191, %16 : vector<22x128xf32>
    %c13_i32 = arith.constant 13 : i32
    %193 = vector.broadcast %c13_i32 : i32 to vector<22x1xi32>
    %194 = arith.cmpi sgt, %17, %193 : vector<22x1xi32>
    %195 = vector.broadcast %194 : vector<22x1xi1> to vector<22x128xi1>
    %196 = arith.andi %192, %195 : vector<22x128xi1>
    %197 = arith.ori %190, %196 : vector<22x128xi1>
    %198 = arith.extui %197 : vector<22x128xi1> to vector<22x128xi32>
    %199 = arith.sitofp %198 : vector<22x128xi32> to vector<22x128xf32>
    %200 = arith.addf %187, %199 : vector<22x128xf32>
    %201 = vector.extract_strided_slice %16 {offsets = [14, 0], sizes = [1, 128], strides = [1, 1]} : vector<22x128xf32> to vector<1x128xf32>
    %202 = vector.broadcast %201 : vector<1x128xf32> to vector<22x128xf32>
    %203 = arith.cmpf ogt, %202, %16 : vector<22x128xf32>
    %204 = vector.broadcast %201 : vector<1x128xf32> to vector<22x128xf32>
    %205 = arith.cmpf oeq, %204, %16 : vector<22x128xf32>
    %c14_i32 = arith.constant 14 : i32
    %206 = vector.broadcast %c14_i32 : i32 to vector<22x1xi32>
    %207 = arith.cmpi sgt, %17, %206 : vector<22x1xi32>
    %208 = vector.broadcast %207 : vector<22x1xi1> to vector<22x128xi1>
    %209 = arith.andi %205, %208 : vector<22x128xi1>
    %210 = arith.ori %203, %209 : vector<22x128xi1>
    %211 = arith.extui %210 : vector<22x128xi1> to vector<22x128xi32>
    %212 = arith.sitofp %211 : vector<22x128xi32> to vector<22x128xf32>
    %213 = arith.addf %200, %212 : vector<22x128xf32>
    %214 = vector.extract_strided_slice %16 {offsets = [15, 0], sizes = [1, 128], strides = [1, 1]} : vector<22x128xf32> to vector<1x128xf32>
    %215 = vector.broadcast %214 : vector<1x128xf32> to vector<22x128xf32>
    %216 = arith.cmpf ogt, %215, %16 : vector<22x128xf32>
    %217 = vector.broadcast %214 : vector<1x128xf32> to vector<22x128xf32>
    %218 = arith.cmpf oeq, %217, %16 : vector<22x128xf32>
    %c15_i32 = arith.constant 15 : i32
    %219 = vector.broadcast %c15_i32 : i32 to vector<22x1xi32>
    %220 = arith.cmpi sgt, %17, %219 : vector<22x1xi32>
    %221 = vector.broadcast %220 : vector<22x1xi1> to vector<22x128xi1>
    %222 = arith.andi %218, %221 : vector<22x128xi1>
    %223 = arith.ori %216, %222 : vector<22x128xi1>
    %224 = arith.extui %223 : vector<22x128xi1> to vector<22x128xi32>
    %225 = arith.sitofp %224 : vector<22x128xi32> to vector<22x128xf32>
    %226 = arith.addf %213, %225 : vector<22x128xf32>
    %227 = vector.extract_strided_slice %16 {offsets = [16, 0], sizes = [1, 128], strides = [1, 1]} : vector<22x128xf32> to vector<1x128xf32>
    %228 = vector.broadcast %227 : vector<1x128xf32> to vector<22x128xf32>
    %229 = arith.cmpf ogt, %228, %16 : vector<22x128xf32>
    %230 = vector.broadcast %227 : vector<1x128xf32> to vector<22x128xf32>
    %231 = arith.cmpf oeq, %230, %16 : vector<22x128xf32>
    %c16_i32 = arith.constant 16 : i32
    %232 = vector.broadcast %c16_i32 : i32 to vector<22x1xi32>
    %233 = arith.cmpi sgt, %17, %232 : vector<22x1xi32>
    %234 = vector.broadcast %233 : vector<22x1xi1> to vector<22x128xi1>
    %235 = arith.andi %231, %234 : vector<22x128xi1>
    %236 = arith.ori %229, %235 : vector<22x128xi1>
    %237 = arith.extui %236 : vector<22x128xi1> to vector<22x128xi32>
    %238 = arith.sitofp %237 : vector<22x128xi32> to vector<22x128xf32>
    %239 = arith.addf %226, %238 : vector<22x128xf32>
    %240 = vector.extract_strided_slice %16 {offsets = [17, 0], sizes = [1, 128], strides = [1, 1]} : vector<22x128xf32> to vector<1x128xf32>
    %241 = vector.broadcast %240 : vector<1x128xf32> to vector<22x128xf32>
    %242 = arith.cmpf ogt, %241, %16 : vector<22x128xf32>
    %243 = vector.broadcast %240 : vector<1x128xf32> to vector<22x128xf32>
    %244 = arith.cmpf oeq, %243, %16 : vector<22x128xf32>
    %c17_i32 = arith.constant 17 : i32
    %245 = vector.broadcast %c17_i32 : i32 to vector<22x1xi32>
    %246 = arith.cmpi sgt, %17, %245 : vector<22x1xi32>
    %247 = vector.broadcast %246 : vector<22x1xi1> to vector<22x128xi1>
    %248 = arith.andi %244, %247 : vector<22x128xi1>
    %249 = arith.ori %242, %248 : vector<22x128xi1>
    %250 = arith.extui %249 : vector<22x128xi1> to vector<22x128xi32>
    %251 = arith.sitofp %250 : vector<22x128xi32> to vector<22x128xf32>
    %252 = arith.addf %239, %251 : vector<22x128xf32>
    %253 = vector.extract_strided_slice %16 {offsets = [18, 0], sizes = [1, 128], strides = [1, 1]} : vector<22x128xf32> to vector<1x128xf32>
    %254 = vector.broadcast %253 : vector<1x128xf32> to vector<22x128xf32>
    %255 = arith.cmpf ogt, %254, %16 : vector<22x128xf32>
    %256 = vector.broadcast %253 : vector<1x128xf32> to vector<22x128xf32>
    %257 = arith.cmpf oeq, %256, %16 : vector<22x128xf32>
    %c18_i32 = arith.constant 18 : i32
    %258 = vector.broadcast %c18_i32 : i32 to vector<22x1xi32>
    %259 = arith.cmpi sgt, %17, %258 : vector<22x1xi32>
    %260 = vector.broadcast %259 : vector<22x1xi1> to vector<22x128xi1>
    %261 = arith.andi %257, %260 : vector<22x128xi1>
    %262 = arith.ori %255, %261 : vector<22x128xi1>
    %263 = arith.extui %262 : vector<22x128xi1> to vector<22x128xi32>
    %264 = arith.sitofp %263 : vector<22x128xi32> to vector<22x128xf32>
    %265 = arith.addf %252, %264 : vector<22x128xf32>
    %266 = vector.extract_strided_slice %16 {offsets = [19, 0], sizes = [1, 128], strides = [1, 1]} : vector<22x128xf32> to vector<1x128xf32>
    %267 = vector.broadcast %266 : vector<1x128xf32> to vector<22x128xf32>
    %268 = arith.cmpf ogt, %267, %16 : vector<22x128xf32>
    %269 = vector.broadcast %266 : vector<1x128xf32> to vector<22x128xf32>
    %270 = arith.cmpf oeq, %269, %16 : vector<22x128xf32>
    %c19_i32 = arith.constant 19 : i32
    %271 = vector.broadcast %c19_i32 : i32 to vector<22x1xi32>
    %272 = arith.cmpi sgt, %17, %271 : vector<22x1xi32>
    %273 = vector.broadcast %272 : vector<22x1xi1> to vector<22x128xi1>
    %274 = arith.andi %270, %273 : vector<22x128xi1>
    %275 = arith.ori %268, %274 : vector<22x128xi1>
    %276 = arith.extui %275 : vector<22x128xi1> to vector<22x128xi32>
    %277 = arith.sitofp %276 : vector<22x128xi32> to vector<22x128xf32>
    %278 = arith.addf %265, %277 : vector<22x128xf32>
    %279 = vector.extract_strided_slice %16 {offsets = [20, 0], sizes = [1, 128], strides = [1, 1]} : vector<22x128xf32> to vector<1x128xf32>
    %280 = vector.broadcast %279 : vector<1x128xf32> to vector<22x128xf32>
    %281 = arith.cmpf ogt, %280, %16 : vector<22x128xf32>
    %282 = vector.broadcast %279 : vector<1x128xf32> to vector<22x128xf32>
    %283 = arith.cmpf oeq, %282, %16 : vector<22x128xf32>
    %c20_i32 = arith.constant 20 : i32
    %284 = vector.broadcast %c20_i32 : i32 to vector<22x1xi32>
    %285 = arith.cmpi sgt, %17, %284 : vector<22x1xi32>
    %286 = vector.broadcast %285 : vector<22x1xi1> to vector<22x128xi1>
    %287 = arith.andi %283, %286 : vector<22x128xi1>
    %288 = arith.ori %281, %287 : vector<22x128xi1>
    %289 = arith.extui %288 : vector<22x128xi1> to vector<22x128xi32>
    %290 = arith.sitofp %289 : vector<22x128xi32> to vector<22x128xf32>
    %291 = arith.addf %278, %290 : vector<22x128xf32>
    %292 = vector.extract_strided_slice %16 {offsets = [21, 0], sizes = [1, 128], strides = [1, 1]} : vector<22x128xf32> to vector<1x128xf32>
    %293 = vector.broadcast %292 : vector<1x128xf32> to vector<22x128xf32>
    %294 = arith.cmpf ogt, %293, %16 : vector<22x128xf32>
    %295 = vector.broadcast %292 : vector<1x128xf32> to vector<22x128xf32>
    %296 = arith.cmpf oeq, %295, %16 : vector<22x128xf32>
    %c21_i32 = arith.constant 21 : i32
    %297 = vector.broadcast %c21_i32 : i32 to vector<22x1xi32>
    %298 = arith.cmpi sgt, %17, %297 : vector<22x1xi32>
    %299 = vector.broadcast %298 : vector<22x1xi1> to vector<22x128xi1>
    %300 = arith.andi %296, %299 : vector<22x128xi1>
    %301 = arith.ori %294, %300 : vector<22x128xi1>
    %302 = arith.extui %301 : vector<22x128xi1> to vector<22x128xi32>
    %303 = arith.sitofp %302 : vector<22x128xi32> to vector<22x128xf32>
    %304 = arith.addf %291, %303 : vector<22x128xf32>
    %cst_14 = arith.constant 8.000000e+00 : f32
    %305 = vector.broadcast %cst_14 : f32 to vector<22x128xf32>
    %306 = arith.cmpf olt, %304, %305 : vector<22x128xf32>
    %cst_15 = arith.constant 0.000000e+00 : f32
    %307 = vector.broadcast %cst_15 : f32 to vector<22x128xf32>
    %308 = arith.select %306, %16, %307 : vector<22x128xi1>, vector<22x128xf32>
    %c0_16 = arith.constant 0 : index
    %c0_17 = arith.constant 0 : index
    %c0_18 = arith.constant 0 : index
    %309 = vector.load %arg7[%c0_16, %c0_17, %c0_18] : memref<1x22x128xf32, #tpu.memory_space<vmem>>, vector<1x22x128xf32>
    %310 = vector.shape_cast %309 : vector<1x22x128xf32> to vector<22x128xf32>
    %311 = vector.shape_cast %308 : vector<22x128xf32> to vector<1x22x128xf32>
    tpu.vector_store %arg7[%c0_16, %c0_17, %c0_18], %311 {strides = array<i32>} : memref<1x22x128xf32, #tpu.memory_space<vmem>>, vector<1x22x128xf32>,
    return
  }
  func.func @transform_0(%arg0: i32, %arg1: i32) -> (i32, i32, i32) {
    %c0_i32 = arith.constant 0 : i32
    %c0_i32_0 = arith.constant 0 : i32
    return %arg0, %arg1, %c0_i32 : i32, i32, i32
  }
  func.func @transform_1(%arg0: i32, %arg1: i32) -> (i32, i32) {
    %c0_i32 = arith.constant 0 : i32
    %c0_i32_0 = arith.constant 0 : i32
    %c0_i32_1 = arith.constant 0 : i32
    return %c0_i32, %c0_i32_0 : i32, i32
  }
  func.func @transform_2(%arg0: i32, %arg1: i32) -> (i32, i32) {
    %c0_i32 = arith.constant 0 : i32
    %c0_i32_0 = arith.constant 0 : i32
    %c0_i32_1 = arith.constant 0 : i32
    return %c0_i32, %c0_i32_0 : i32, i32
  }
  func.func @transform_3(%arg0: i32, %arg1: i32) -> (i32, i32) {
    %c0_i32 = arith.constant 0 : i32
    %c0_i32_0 = arith.constant 0 : i32
    %c0_i32_1 = arith.constant 0 : i32
    return %c0_i32, %c0_i32_0 : i32, i32
  }
  func.func @transform_4(%arg0: i32, %arg1: i32) -> (i32, i32) {
    %c0_i32 = arith.constant 0 : i32
    %c0_i32_0 = arith.constant 0 : i32
    %c0_i32_1 = arith.constant 0 : i32
    return %c0_i32, %c0_i32_0 : i32, i32
  }
  func.func @transform_5(%arg0: i32, %arg1: i32) -> (i32, i32, i32) {
    %c0_i32 = arith.constant 0 : i32
    %c0_i32_0 = arith.constant 0 : i32
    return %arg0, %c0_i32, %arg1 : i32, i32, i32
  }
}

</mosaic_0001>

<llo_original>
// kernel: tpu_custom_call.1
$region0: #{tpu_custom_call.1}
  #allocation0 [shape = 'u32[]', space=smem, size = 0x4, offset = 0x4, fixed_abs, tag = 'smem constant byte address 0x4 - core index']
  #allocation1 [shape = 'u32[72,128]{1,0:T(1,128)}', space=vmem, size = 0x9000, scoped, tag = 'internal scratch']
  %s0 = inlined_call_operand.hbm [shape: f32[2,128,128], index: 0, kind: input, shape index: {}]
  %s1 = inlined_call_operand.vmem [shape: f32[128,64], index: 1, kind: input, shape index: {}]
  %s2 = inlined_call_operand.vmem [shape: f32[1,64], index: 2, kind: input, shape index: {}]
  %s3 = inlined_call_operand.vmem [shape: f32[64,22], index: 3, kind: input, shape index: {}]
  %s4 = inlined_call_operand.vmem [shape: f32[1,22], index: 4, kind: input, shape index: {}]
  %s5 = inlined_call_operand.vmem [shape: f32[2,22,128], index: 5, kind: output, shape index: {}]
  %s6 = sld [smem:[#allocation0]]
  $region57: #{tpu_custom_call.1} parent=0
    _
  %s8 = ssub.s32 1, %s6
  %s9 = scalar_select 0, %s8, %s6
  $region1: #{tpu_custom_call.1} parent=0
    #allocation2 [shape = 'u8[131072]{0}', space=vmem, size = 0x20000, scoped, tag = 'input window, operand 0']
    #allocation3 [shape = 's32[2]{0}', space=sflag, size = 0x8, scoped, tag = 'scoped memory for tpu_custom_call.1']
    %10 = vsyncpa [#allocation3], 0
    %s11 = scalar_lea.sflag [#allocation3], 1
    %12 = vsyncpa %s11, 0
    loop: start=0, step=1, limit=4
    $region2: #{tpu_custom_call.1} parent=1 // loop_pre_header
      _
    $region3: #{tpu_custom_call.1} parent=1 // loop_header
      %s14 = sphi 0, %s18
      %p15 = scmp.ge.s32.totalorder %s14, 4
      %s21 = sphi 0, %s33
      %s22 = sphi 0, %s29
      %s23 = sphi 0, %s21
      %s24 = sphi 0, %s22
      %s25 = sphi 0, %s23
      %s26 = sphi 0, %s24
      %s38 = sphi 0, %s40
      %s41 = sphi 0, %s38
      %s42 = sphi 0, %s41
      %s58 = sphi 0, %s42
      %s62 = sphi 0, %s62
      %s64 = sphi 0, %s62
      %s65 = sphi 0, %s64
      %s79 = sphi 0, %s65
      %s83 = sphi 0, %s83
      %s85 = sphi 0, %s83
      %s86 = sphi 0, %s85
      %s100 = sphi 0, %s86
      %s104 = sphi 0, %s104
      %s106 = sphi 0, %s104
      %s107 = sphi 0, %s106
      %s121 = sphi 0, %s107
      %s125 = sphi 0, %s125
      %s127 = sphi 0, %s125
      %s128 = sphi 0, %s127
      %s142 = sphi 0, %s128
      %s150 = sphi 0, %s152
      %s153 = sphi 0, %s150
      %s154 = sphi 0, %s153
      %s170 = sphi 0, %s154
    $region4: #{tpu_custom_call.1} parent=1 // loop_header_branch
      %17 = sbr.rel (%p15) target = $region8
    $region5: #{tpu_custom_call.1} parent=1 // loop_body
      %s19 = ssub.s32 %s14, 1
      %s20 = ssub.s32 %s14, 2
      %s27 = sadd.s32 1, %s22
      %p28 = scmp.ge.s32.totalorder %s27, 1
      %s29 = scalar_select %p28, 0, %s27
      %s30 = sadd.s32 1, %s21
      %s31 = scalar_select %p28, %s30, %s21
      %p32 = scmp.ge.s32.totalorder %s31, 2
      %s33 = scalar_select %p32, 0, %s31
      %s34 = ssub.s32 %s21, %s33
      %s35 = ssub.s32 %s22, %s29
      %s36 = sor.u32 %s34, %s35
      %p37 = scmp.eq.s32.totalorder %s36, 0
      %s39 = sadd.s32 %s38, 1
      %s40 = scalar_select %p37, %s38, %s39
      %p43 = pneg %p37
      %p44 = scmp.eq.s32.totalorder %s14, 1
      %p45 = por %p43, %p44
      %p46 = scmp.ne.s32.totalorder %s38, %s41
      %p47 = scmp.eq.s32.totalorder %s14, 0
      %p48 = por %p46, %p47
      %p49 = scmp.ne.s32.totalorder %s38, %s41
      %p50 = scmp.eq.s32.totalorder %s19, 1
      %p51 = por %p49, %p50
      %p52 = scmp.ne.s32.totalorder %s41, %s42
      %p53 = scmp.eq.s32.totalorder %s19, 0
      %p54 = por %p52, %p53
      %p55 = scmp.ne.s32.totalorder %s41, %s42
      %p56 = scmp.eq.s32.totalorder %s20, 1
      %p57 = por %p55, %p56
      %p59 = scmp.ne.s32.totalorder %s42, %s58
      %p60 = scmp.eq.s32.totalorder %s20, 0
      %p61 = por %p59, %p60
      %s63 = sadd.s32 %s62, 1
      %p66 = scmp.eq.s32.totalorder %s14, 1
      %p67 = scmp.ne.s32.totalorder %s62, %s64
      %p68 = scmp.eq.s32.totalorder %s14, 0
      %p69 = por %p67, %p68
      %p70 = scmp.ne.s32.totalorder %s62, %s64
      %p71 = scmp.eq.s32.totalorder %s19, 1
      %p72 = por %p70, %p71
      %p73 = scmp.ne.s32.totalorder %s64, %s65
      %p74 = scmp.eq.s32.totalorder %s19, 0
      %p75 = por %p73, %p74
      %p76 = scmp.ne.s32.totalorder %s64, %s65
      %p77 = scmp.eq.s32.totalorder %s20, 1
      %p78 = por %p76, %p77
      %p80 = scmp.ne.s32.totalorder %s65, %s79
      %p81 = scmp.eq.s32.totalorder %s20, 0
      %p82 = por %p80, %p81
      %s84 = sadd.s32 %s83, 1
      %p87 = scmp.eq.s32.totalorder %s14, 1
      %p88 = scmp.ne.s32.totalorder %s83, %s85
      %p89 = scmp.eq.s32.totalorder %s14, 0
      %p90 = por %p88, %p89
      %p91 = scmp.ne.s32.totalorder %s83, %s85
      %p92 = scmp.eq.s32.totalorder %s19, 1
      %p93 = por %p91, %p92
      %p94 = scmp.ne.s32.totalorder %s85, %s86
      %p95 = scmp.eq.s32.totalorder %s19, 0
      %p96 = por %p94, %p95
      %p97 = scmp.ne.s32.totalorder %s85, %s86
      %p98 = scmp.eq.s32.totalorder %s20, 1
      %p99 = por %p97, %p98
      %p101 = scmp.ne.s32.totalorder %s86, %s100
      %p102 = scmp.eq.s32.totalorder %s20, 0
      %p103 = por %p101, %p102
      %s105 = sadd.s32 %s104, 1
      %p108 = scmp.eq.s32.totalorder %s14, 1
      %p109 = scmp.ne.s32.totalorder %s104, %s106
      %p110 = scmp.eq.s32.totalorder %s14, 0
      %p111 = por %p109, %p110
      %p112 = scmp.ne.s32.totalorder %s104, %s106
      %p113 = scmp.eq.s32.totalorder %s19, 1
      %p114 = por %p112, %p113
      %p115 = scmp.ne.s32.totalorder %s106, %s107
      %p116 = scmp.eq.s32.totalorder %s19, 0
      %p117 = por %p115, %p116
      %p118 = scmp.ne.s32.totalorder %s106, %s107
      %p119 = scmp.eq.s32.totalorder %s20, 1
      %p120 = por %p118, %p119
      %p122 = scmp.ne.s32.totalorder %s107, %s121
      %p123 = scmp.eq.s32.totalorder %s20, 0
      %p124 = por %p122, %p123
      %s126 = sadd.s32 %s125, 1
      %p129 = scmp.eq.s32.totalorder %s14, 1
      %p130 = scmp.ne.s32.totalorder %s125, %s127
      %p131 = scmp.eq.s32.totalorder %s14, 0
      %p132 = por %p130, %p131
      %p133 = scmp.ne.s32.totalorder %s125, %s127
      %p134 = scmp.eq.s32.totalorder %s19, 1
      %p135 = por %p133, %p134
      %p136 = scmp.ne.s32.totalorder %s127, %s128
      %p137 = scmp.eq.s32.totalorder %s19, 0
      %p138 = por %p136, %p137
      %p139 = scmp.ne.s32.totalorder %s127, %s128
      %p140 = scmp.eq.s32.totalorder %s20, 1
      %p141 = por %p139, %p140
      %p143 = scmp.ne.s32.totalorder %s128, %s142
      %p144 = scmp.eq.s32.totalorder %s20, 0
      %p145 = por %p143, %p144
      %s146 = ssub.s32 %s21, %s33
      %s147 = ssub.s32 %s22, %s29
      %s148 = sor.u32 %s146, %s147
      %p149 = scmp.eq.s32.totalorder %s148, 0
      %s151 = sadd.s32 %s150, 1
      %s152 = scalar_select %p149, %s150, %s151
      %p155 = pneg %p149
      %p156 = scmp.eq.s32.totalorder %s14, 1
      %p157 = por %p155, %p156
      %p158 = scmp.ne.s32.totalorder %s150, %s153
      %p159 = scmp.eq.s32.totalorder %s14, 0
      %p160 = por %p158, %p159
      %p161 = scmp.ne.s32.totalorder %s150, %s153
      %p162 = scmp.eq.s32.totalorder %s19, 1
      %p163 = por %p161, %p162
      %p164 = scmp.ne.s32.totalorder %s153, %s154
      %p165 = scmp.eq.s32.totalorder %s19, 0
      %p166 = por %p164, %p165
      %p167 = scmp.ne.s32.totalorder %s153, %s154
      %p168 = scmp.eq.s32.totalorder %s20, 1
      %p169 = por %p167, %p168
      %p171 = scmp.ne.s32.totalorder %s154, %s170
      %p172 = scmp.eq.s32.totalorder %s20, 0
      %p173 = por %p171, %p172
      %p174 = scmp.le.s32.totalorder 1, %s14
      %p175 = scmp.lt.s32.totalorder %s14, 3
      %p176 = pnand %p174, %p175
      %p177 = pneg %p176
      // Predicated region
      $region9: #{tpu_custom_call.1} parent=5 // pred_check
        _
      $region10: #{tpu_custom_call.1} parent=5 // pred_check_branch
        %179 = sbr.rel (%p176) target = $region12
      $region11: #{tpu_custom_call.1} parent=5 // pred_region
        %s180 = ssub.s32 %s14, 1
        // Predicated region
        $region13: #{tpu_custom_call.1} parent=11 // pred_check
          %p181 = pneg %p75
        $region14: #{tpu_custom_call.1} parent=11 // pred_check_branch
          %183 = sbr.rel (%p181) target = $region16
        $region15: #{tpu_custom_call.1} parent=11 // pred_region
          _
        $region16: #{tpu_custom_call.1} parent=11 // pred_fallthru
          _
        // Predicated region
        $region17: #{tpu_custom_call.1} parent=11 // pred_check
          %p184 = pneg %p96
        $region18: #{tpu_custom_call.1} parent=11 // pred_check_branch
          %186 = sbr.rel (%p184) target = $region20
        $region19: #{tpu_custom_call.1} parent=11 // pred_region
          _
        $region20: #{tpu_custom_call.1} parent=11 // pred_fallthru
          _
        // Predicated region
        $region21: #{tpu_custom_call.1} parent=11 // pred_check
          %p187 = pneg %p117
        $region22: #{tpu_custom_call.1} parent=11 // pred_check_branch
          %189 = sbr.rel (%p187) target = $region24
        $region23: #{tpu_custom_call.1} parent=11 // pred_region
          _
        $region24: #{tpu_custom_call.1} parent=11 // pred_fallthru
          _
        // Predicated region
        $region25: #{tpu_custom_call.1} parent=11 // pred_check
          %p190 = pneg %p138
        $region26: #{tpu_custom_call.1} parent=11 // pred_check_branch
          %192 = sbr.rel (%p190) target = $region28
        $region27: #{tpu_custom_call.1} parent=11 // pred_region
          _
        $region28: #{tpu_custom_call.1} parent=11 // pred_fallthru
          _
      $region12: #{tpu_custom_call.1} parent=5 // pred_fallthru
        _
      %p193 = scmp.lt.s32.totalorder %s14, 2
      // Predicated region
      $region29: #{tpu_custom_call.1} parent=5 // pred_check
        %p194 = pneg %p193
      $region30: #{tpu_custom_call.1} parent=5 // pred_check_branch
        %196 = sbr.rel (%p194) target = $region32
      $region31: #{tpu_custom_call.1} parent=5 // pred_region
        // Predicated region
        $region33: #{tpu_custom_call.1} parent=31 // pred_check
          %p197 = pneg %p48
        $region34: #{tpu_custom_call.1} parent=31 // pred_check_branch
          %199 = sbr.rel (%p197) target = $region36
        $region35: #{tpu_custom_call.1} parent=31 // pred_region
          %s200 = sand.u32 %s38, 1
          %s201 = scalar_lea.sflag [#allocation3], %s200
          %s202 = sand.u32 %s38, 1
          %s203 = smul.addr %s202, 128
          %s204 = scalar_lea.vmem [#allocation2], %s203
          %s205 = smul.u32 16, %s22
          %207 = vsyncadd %s201, 0
          %s208 = smul.addr %s21, 16
          %s209 = sadd.s32 %s205, %s208
          %s210 = smul.addr %s209, 8
          %s211 = scalar_lea.hbm %s0, %s210
          %s212 = sshll.u32 %s211, 4
          %s213 = int_to_ptr.hbm [resolvable:$true] %s212
          %s214 = sshll.u32 %s204, 4
          %s215 = int_to_ptr.vmem [resolvable:$true] %s214
          %220 = dma.hbm_to_vmem [thread:$0]  %s213, 2048, %s215, %s201, 128, 128, 8
        $region36: #{tpu_custom_call.1} parent=31 // pred_fallthru
          _
      $region32: #{tpu_custom_call.1} parent=5 // pred_fallthru
        _
      %p221 = scmp.le.s32.totalorder 1, %s14
      %p222 = scmp.lt.s32.totalorder %s14, 3
      %p223 = pnand %p221, %p222
      %p224 = pneg %p223
      // Predicated region
      $region37: #{tpu_custom_call.1} parent=5 // pred_check
        _
      $region38: #{tpu_custom_call.1} parent=5 // pred_check_branch
        %226 = sbr.rel (%p223) target = $region40
      $region39: #{tpu_custom_call.1} parent=5 // pred_region
        %s227 = ssub.s32 %s14, 1
        %s228 = sand.u32 %s41, 1
        %s229 = scalar_lea.sflag [#allocation3], %s228
        %s230 = sand.u32 %s41, 1
        %s231 = smul.addr %s230, 128
        %s232 = scalar_lea.vmem [#allocation2], %s231
        // Predicated region
        $region41: #{tpu_custom_call.1} parent=39 // pred_check
          %p233 = pneg %p54
        $region42: #{tpu_custom_call.1} parent=39 // pred_check_branch
          %235 = sbr.rel (%p233) target = $region44
        $region43: #{tpu_custom_call.1} parent=39 // pred_region
          %237 = dma.done %s229, 2048
        $region44: #{tpu_custom_call.1} parent=39 // pred_fallthru
          _
        %s238 = sand.u32 %s41, 1
        %s239 = scalar_lea.sflag [#allocation3], %s238
        %s240 = sand.u32 %s41, 1
        %s241 = smul.addr %s240, 128
        %s242 = scalar_lea.vmem [#allocation2], %s241
        %p243 = pneg %p54
        %p244 = pneg %p51
        %p245 = pneg %p75
        %p246 = pneg %p72
        %p247 = pneg %p96
        %p248 = pneg %p93
        %p249 = pneg %p117
        %p250 = pneg %p114
        %p251 = pneg %p138
        %p252 = pneg %p135
        %p253 = pneg %p166
        %p254 = pneg %p163
        %p255 = scmp.lt.s32.totalorder %s23, 1
        %s256 = scalar_select %p255, %s23, 1
        %p257 = scmp.lt.s32.totalorder %s24, 0
        %s258 = scalar_select %p257, %s24, 0
        %s259 = smul.addr %s256, 3
        %s260 = sadd.s32 %s258, %s259
        %s261 = smul.addr %s260, 8
        %s262 = scalar_lea.vmem %s5, %s261
        %s263 = smul.u32 16, %s24
        %p264 = scmp.lt.s32.totalorder %s23, 1
        %s265 = scalar_select %p264, %s23, 1
        %p266 = scmp.lt.s32.totalorder %s24, 0
        %s267 = scalar_select %p266, %s24, 0
        %s268 = smul.addr %s265, 3
        %s269 = sadd.s32 %s267, %s268
        %s270 = smul.addr %s269, 8
        %s271 = scalar_lea.vmem %s5, %s270
        %v272 = vld [vmem:[%s232] sm:$0xff]
        %v273 = vld [vmem:[%s232 + $0x8] sm:$0xff]
        %v274 = vld [vmem:[%s232 + $0x10] sm:$0xff]
        %v275 = vld [vmem:[%s232 + $0x18] sm:$0xff]
        %v276 = vld [vmem:[%s232 + $0x20] sm:$0xff]
        %v277 = vld [vmem:[%s232 + $0x28] sm:$0xff]
        %v278 = vld [vmem:[%s232 + $0x30] sm:$0xff]
        %v279 = vld [vmem:[%s232 + $0x38] sm:$0xff]
        %v280 = vld [vmem:[%s232 + $0x40] sm:$0xff]
        %v281 = vld [vmem:[%s232 + $0x48] sm:$0xff]
        %v282 = vld [vmem:[%s232 + $0x50] sm:$0xff]
        %v283 = vld [vmem:[%s232 + $0x58] sm:$0xff]
        %v284 = vld [vmem:[%s232 + $0x60] sm:$0xff]
        %v285 = vld [vmem:[%s232 + $0x68] sm:$0xff]
        %v286 = vld [vmem:[%s232 + $0x70] sm:$0xff]
        %v287 = vld [vmem:[%s232 + $0x78] sm:$0xff]
        %v288 = vld [vmem:[%s1] sm:$0xff]
        %v289 = vld [vmem:[%s1 + $0x8] sm:$0xff]
        %v290 = vld [vmem:[%s1 + $0x10] sm:$0xff]
        %v291 = vld [vmem:[%s1 + $0x18] sm:$0xff]
        %v292 = vld [vmem:[%s1 + $0x20] sm:$0xff]
        %v293 = vld [vmem:[%s1 + $0x28] sm:$0xff]
        %v294 = vld [vmem:[%s1 + $0x30] sm:$0xff]
        %v295 = vld [vmem:[%s1 + $0x38] sm:$0xff]
        %v296 = vld [vmem:[%s1 + $0x40] sm:$0xff]
        %v297 = vld [vmem:[%s1 + $0x48] sm:$0xff]
        %v298 = vld [vmem:[%s1 + $0x50] sm:$0xff]
        %v299 = vld [vmem:[%s1 + $0x58] sm:$0xff]
        %v300 = vld [vmem:[%s1 + $0x60] sm:$0xff]
        %v301 = vld [vmem:[%s1 + $0x68] sm:$0xff]
        %v302 = vld [vmem:[%s1 + $0x70] sm:$0xff]
        %v303 = vld [vmem:[%s1 + $0x78] sm:$0xff]
        %v304 = vld [vmem:[%s2] sm:$0x1]
        %v306 = vperm.slane %v304, 0
        %308 = vmatpush.msra.mxu0 %v303
        %309 = vmatpush.msra.mxu0 %v302
        %310 = vmatpush.msra.mxu0 %v301
        %311 = vmatpush.msra.mxu0 %v300
        %312 = vmatpush.msra.mxu0 %v299
        %313 = vmatpush.msra.mxu0 %v298
        %314 = vmatpush.msra.mxu0 %v297
        %315 = vmatpush.msra.mxu0 %v296
        %316 = vmatpush.msra.mxu0 %v295
        %317 = vmatpush.msra.mxu0 %v294
        %318 = vmatpush.msra.mxu0 %v293
        %319 = vmatpush.msra.mxu0 %v292
        %320 = vmatpush.msra.mxu0 %v291
        %321 = vmatpush.msra.mxu0 %v290
        %322 = vmatpush.msra.mxu0 %v289
        %323 = vmatpush.msra.mxu0 %v288
        %324 = vmatmul.f32.gmra.mxu0 %v272
        %v325 = vpop.f32.mrf.mxu0
        %v326 = vadd.f32 %v306, %v325
        %327 = vmatmul.f32.gmra.mxu0 %v273
        %v328 = vpop.f32.mrf.mxu0
        %v329 = vadd.f32 %v306, %v328
        %330 = vmatmul.f32.gmra.mxu0 %v274
        %v331 = vpop.f32.mrf.mxu0
        %v332 = vadd.f32 %v306, %v331
        %333 = vmatmul.f32.gmra.mxu0 %v275
        %v334 = vpop.f32.mrf.mxu0
        %v335 = vadd.f32 %v306, %v334
        %336 = vmatmul.f32.gmra.mxu0 %v276
        %v337 = vpop.f32.mrf.mxu0
        %v338 = vadd.f32 %v306, %v337
        %339 = vmatmul.f32.gmra.mxu0 %v277
        %v340 = vpop.f32.mrf.mxu0
        %v341 = vadd.f32 %v306, %v340
        %342 = vmatmul.f32.gmra.mxu0 %v278
        %v343 = vpop.f32.mrf.mxu0
        %v344 = vadd.f32 %v306, %v343
        %345 = vmatmul.f32.gmra.mxu0 %v279
        %v346 = vpop.f32.mrf.mxu0
        %v347 = vadd.f32 %v306, %v346
        %348 = vmatmul.f32.gmra.mxu0 %v280
        %v349 = vpop.f32.mrf.mxu0
        %v350 = vadd.f32 %v306, %v349
        %351 = vmatmul.f32.gmra.mxu0 %v281
        %v352 = vpop.f32.mrf.mxu0
        %v353 = vadd.f32 %v306, %v352
        %354 = vmatmul.f32.gmra.mxu0 %v282
        %v355 = vpop.f32.mrf.mxu0
        %v356 = vadd.f32 %v306, %v355
        %357 = vmatmul.f32.gmra.mxu0 %v283
        %v358 = vpop.f32.mrf.mxu0
        %v359 = vadd.f32 %v306, %v358
        %360 = vmatmul.f32.gmra.mxu0 %v284
        %v361 = vpop.f32.mrf.mxu0
        %v362 = vadd.f32 %v306, %v361
        %363 = vmatmul.f32.gmra.mxu0 %v285
        %v364 = vpop.f32.mrf.mxu0
        %v365 = vadd.f32 %v306, %v364
        %366 = vmatmul.f32.gmra.mxu0 %v286
        %v367 = vpop.f32.mrf.mxu0
        %v368 = vadd.f32 %v306, %v367
        %369 = vmatmul.f32.gmra.mxu0 %v287
        %v370 = vpop.f32.mrf.mxu0
        %v371 = vadd.f32 %v306, %v370
        %372 = vdwg.mxu0
        %v373 = vmax.f32 %v326, 0.0
        %v374 = vmax.f32 %v329, 0.0
        %v375 = vmax.f32 %v332, 0.0
        %v376 = vmax.f32 %v335, 0.0
        %v377 = vmax.f32 %v338, 0.0
        %v378 = vmax.f32 %v341, 0.0
        %v379 = vmax.f32 %v344, 0.0
        %v380 = vmax.f32 %v347, 0.0
        %v381 = vmax.f32 %v350, 0.0
        %v382 = vmax.f32 %v353, 0.0
        %v383 = vmax.f32 %v356, 0.0
        %v384 = vmax.f32 %v359, 0.0
        %v385 = vmax.f32 %v362, 0.0
        %v386 = vmax.f32 %v365, 0.0
        %v387 = vmax.f32 %v368, 0.0
        %v388 = vmax.f32 %v371, 0.0
        %v389 = vld [vmem:[%s3] sm:$0xff]
        %v390 = vld [vmem:[%s3 + $0x8] sm:$0xff]
        %v391 = vld [vmem:[%s3 + $0x10] sm:$0xff]
        %v392 = vld [vmem:[%s3 + $0x18] sm:$0xff]
        %v393 = vld [vmem:[%s3 + $0x20] sm:$0xff]
        %v394 = vld [vmem:[%s3 + $0x28] sm:$0xff]
        %v395 = vld [vmem:[%s3 + $0x30] sm:$0xff]
        %v396 = vld [vmem:[%s3 + $0x38] sm:$0xff]
        %v397 = vld [vmem:[%s4] sm:$0x1]
        %v399 = vperm.slane %v397, 0
        %vm401 = vcmask 523264
        %v403 = vsel %vm401, %v373, 0
        %v406 = vsel %vm401, %v374, 0
        %v409 = vsel %vm401, %v375, 0
        %v412 = vsel %vm401, %v376, 0
        %v415 = vsel %vm401, %v377, 0
        %v418 = vsel %vm401, %v378, 0
        %v421 = vsel %vm401, %v379, 0
        %v424 = vsel %vm401, %v380, 0
        %v427 = vsel %vm401, %v381, 0
        %v430 = vsel %vm401, %v382, 0
        %v433 = vsel %vm401, %v383, 0
        %v436 = vsel %vm401, %v384, 0
        %v439 = vsel %vm401, %v385, 0
        %v442 = vsel %vm401, %v386, 0
        %v445 = vsel %vm401, %v387, 0
        %v448 = vsel %vm401, %v388, 0
        %450 = vmatpush.msra.mxu0 0.0
        %451 = vmatpush.msra.mxu0 0.0
        %452 = vmatpush.msra.mxu0 0.0
        %453 = vmatpush.msra.mxu0 0.0
        %454 = vmatpush.msra.mxu0 0.0
        %455 = vmatpush.msra.mxu0 0.0
        %456 = vmatpush.msra.mxu0 0.0
        %457 = vmatpush.msra.mxu0 0.0
        %458 = vmatpush.msra.mxu0 %v396
        %459 = vmatpush.msra.mxu0 %v395
        %460 = vmatpush.msra.mxu0 %v394
        %461 = vmatpush.msra.mxu0 %v393
        %462 = vmatpush.msra.mxu0 %v392
        %463 = vmatpush.msra.mxu0 %v391
        %464 = vmatpush.msra.mxu0 %v390
        %465 = vmatpush.msra.mxu0 %v389
        %466 = vmatmul.f32.gmra.mxu0 %v403
        %v467 = vpop.f32.mrf.mxu0
        %v468 = vadd.f32 %v399, %v467
        %469 = vmatmul.f32.gmra.mxu0 %v406
        %v470 = vpop.f32.mrf.mxu0
        %v471 = vadd.f32 %v399, %v470
        %472 = vmatmul.f32.gmra.mxu0 %v409
        %v473 = vpop.f32.mrf.mxu0
        %v474 = vadd.f32 %v399, %v473
        %475 = vmatmul.f32.gmra.mxu0 %v412
        %v476 = vpop.f32.mrf.mxu0
        %v477 = vadd.f32 %v399, %v476
        %478 = vmatmul.f32.gmra.mxu0 %v415
        %v479 = vpop.f32.mrf.mxu0
        %v480 = vadd.f32 %v399, %v479
        %481 = vmatmul.f32.gmra.mxu0 %v418
        %v482 = vpop.f32.mrf.mxu0
        %v483 = vadd.f32 %v399, %v482
        %484 = vmatmul.f32.gmra.mxu0 %v421
        %v485 = vpop.f32.mrf.mxu0
        %v486 = vadd.f32 %v399, %v485
        %487 = vmatmul.f32.gmra.mxu0 %v424
        %v488 = vpop.f32.mrf.mxu0
        %v489 = vadd.f32 %v399, %v488
        %490 = vmatmul.f32.gmra.mxu0 %v427
        %v491 = vpop.f32.mrf.mxu0
        %v492 = vadd.f32 %v399, %v491
        %493 = vmatmul.f32.gmra.mxu0 %v430
        %v494 = vpop.f32.mrf.mxu0
        %v495 = vadd.f32 %v399, %v494
        %496 = vmatmul.f32.gmra.mxu0 %v433
        %v497 = vpop.f32.mrf.mxu0
        %v498 = vadd.f32 %v399, %v497
        %499 = vmatmul.f32.gmra.mxu0 %v436
        %v500 = vpop.f32.mrf.mxu0
        %v501 = vadd.f32 %v399, %v500
        %502 = vmatmul.f32.gmra.mxu0 %v439
        %v503 = vpop.f32.mrf.mxu0
        %v504 = vadd.f32 %v399, %v503
        %505 = vmatmul.f32.gmra.mxu0 %v442
        %v506 = vpop.f32.mrf.mxu0
        %v507 = vadd.f32 %v399, %v506
        %508 = vmatmul.f32.gmra.mxu0 %v445
        %v509 = vpop.f32.mrf.mxu0
        %v510 = vadd.f32 %v399, %v509
        %511 = vmatmul.f32.gmra.mxu0 %v448
        %v512 = vpop.f32.mrf.mxu0
        %v513 = vadd.f32 %v399, %v512
        %514 = vdwg.mxu0
        %v515 = vmax.f32 %v468, 0.0
        %v516 = vmax.f32 %v471, 0.0
        %v517 = vmax.f32 %v474, 0.0
        %v518 = vmax.f32 %v477, 0.0
        %v519 = vmax.f32 %v480, 0.0
        %v520 = vmax.f32 %v483, 0.0
        %v521 = vmax.f32 %v486, 0.0
        %v522 = vmax.f32 %v489, 0.0
        %v523 = vmax.f32 %v492, 0.0
        %v524 = vmax.f32 %v495, 0.0
        %v525 = vmax.f32 %v498, 0.0
        %v526 = vmax.f32 %v501, 0.0
        %v527 = vmax.f32 %v504, 0.0
        %v528 = vmax.f32 %v507, 0.0
        %v529 = vmax.f32 %v510, 0.0
        %v530 = vmax.f32 %v513, 0.0
        %531 = vxpose.xlu0.b32.start [1/16] %v515, 128
        %532 = vxpose.xlu0.b32.cont [2/16] %v516, 128
        %533 = vxpose.xlu0.b32.cont [3/16] %v517, 128
        %534 = vxpose.xlu0.b32.cont [4/16] %v518, 128
        %535 = vxpose.xlu0.b32.cont [5/16] %v519, 128
        %536 = vxpose.xlu0.b32.cont [6/16] %v520, 128
        %537 = vxpose.xlu0.b32.cont [7/16] %v521, 128
        %538 = vxpose.xlu0.b32.cont [8/16] %v522, 128
        %539 = vxpose.xlu0.b32.cont [9/16] %v523, 128
        %540 = vxpose.xlu0.b32.cont [10/16] %v524, 128
        %541 = vxpose.xlu0.b32.cont [11/16] %v525, 128
        %542 = vxpose.xlu0.b32.cont [12/16] %v526, 128
        %543 = vxpose.xlu0.b32.cont [13/16] %v527, 128
        %544 = vxpose.xlu0.b32.cont [14/16] %v528, 128
        %545 = vxpose.xlu0.b32.cont [15/16] %v529, 128
        %546 = vxpose.xlu0.b32.end [16/16] %v530, 128
        %v547 = vpop.trf.xlu0
        %v548 = vpop.trf.xlu0
        %v549 = vpop.trf.xlu0
        %v550 = vpop.trf.xlu0
        %v551 = vpop.trf.xlu0
        %v552 = vpop.trf.xlu0
        %v553 = vpop.trf.xlu0
        %v554 = vpop.trf.xlu0
        %v555 = vpop.trf.xlu0
        %v556 = vpop.trf.xlu0
        %v557 = vpop.trf.xlu0
        %v558 = vpop.trf.xlu0
        %v559 = vpop.trf.xlu0
        %v560 = vpop.trf.xlu0
        %v561 = vpop.trf.xlu0
        %v562 = vpop.trf.xlu0
        %v563 = vlaneseq
        %v564 = vshrl.u32 %v563, 7
        %v565 = vadd.s32 %v564, 8
        %v566 = vadd.s32 %v564, 16
        %v567 = vperm.slane %v547, 0
        %vm568 = vcmp.gt.f32.partialorder %v567, %v547
        %vm569 = vcmp.gt.f32.partialorder %v567, %v548
        %vm570 = vcmp.gt.f32.partialorder %v567, %v549
        %vm571 = vcmp.eq.f32.partialorder %v567, %v547
        %vm572 = vcmp.eq.f32.partialorder %v567, %v548
        %vm573 = vcmp.eq.f32.partialorder %v567, %v549
        %vm574 = vcmp.gt.s32.totalorder %v564, 0
        %vm575 = vcmp.gt.s32.totalorder %v565, 0
        %vm576 = vcmp.gt.s32.totalorder %v566, 0
        %v577 = vsel %vm574, 1, 0
        %v578 = vsel %vm575, 1, 0
        %v579 = vsel %vm576, 1, 0
        %vm580 = vcmp.eq.s32.totalorder %v577, 1
        %vm581 = vcmp.eq.s32.totalorder %v578, 1
        %vm582 = vcmp.eq.s32.totalorder %v579, 1
        %vm583 = vmand %vm571, %vm580
        %vm584 = vmand %vm572, %vm581
        %vm585 = vmand %vm573, %vm582
        %vm586 = vmor %vm568, %vm583
        %vm587 = vmor %vm569, %vm584
        %vm588 = vmor %vm570, %vm585
        %v589 = vsel %vm586, 1, 0
        %v590 = vsel %vm587, 1, 0
        %v591 = vsel %vm588, 1, 0
        %v592 = vcvt.s32.f32 %v589
        %v593 = vcvt.s32.f32 %v590
        %v594 = vcvt.s32.f32 %v591
        %v595 = vadd.f32 %v592, 0.0
        %v596 = vadd.f32 %v593, 0.0
        %v597 = vadd.f32 %v594, 0.0
        %v598 = vperm.slane %v547, 1
        %vm599 = vcmp.gt.f32.partialorder %v598, %v547
        %vm600 = vcmp.gt.f32.partialorder %v598, %v548
        %vm601 = vcmp.gt.f32.partialorder %v598, %v549
        %vm602 = vcmp.eq.f32.partialorder %v598, %v547
        %vm603 = vcmp.eq.f32.partialorder %v598, %v548
        %vm604 = vcmp.eq.f32.partialorder %v598, %v549
        %vm605 = vcmp.gt.s32.totalorder %v564, 1
        %vm606 = vcmp.gt.s32.totalorder %v565, 1
        %vm607 = vcmp.gt.s32.totalorder %v566, 1
        %v608 = vsel %vm605, 1, 0
        %v609 = vsel %vm606, 1, 0
        %v610 = vsel %vm607, 1, 0
        %vm611 = vcmp.eq.s32.totalorder %v608, 1
        %vm612 = vcmp.eq.s32.totalorder %v609, 1
        %vm613 = vcmp.eq.s32.totalorder %v610, 1
        %vm614 = vmand %vm602, %vm611
        %vm615 = vmand %vm603, %vm612
        %vm616 = vmand %vm604, %vm613
        %vm617 = vmor %vm599, %vm614
        %vm618 = vmor %vm600, %vm615
        %vm619 = vmor %vm601, %vm616
        %v620 = vsel %vm617, 1, 0
        %v621 = vsel %vm618, 1, 0
        %v622 = vsel %vm619, 1, 0
        %v623 = vcvt.s32.f32 %v620
        %v624 = vcvt.s32.f32 %v621
        %v625 = vcvt.s32.f32 %v622
        %v626 = vadd.f32 %v595, %v623
        %v627 = vadd.f32 %v596, %v624
        %v628 = vadd.f32 %v597, %v625
        %v629 = vperm.slane %v547, 2
        %vm630 = vcmp.gt.f32.partialorder %v629, %v547
        %vm631 = vcmp.gt.f32.partialorder %v629, %v548
        %vm632 = vcmp.gt.f32.partialorder %v629, %v549
        %vm633 = vcmp.eq.f32.partialorder %v629, %v547
        %vm634 = vcmp.eq.f32.partialorder %v629, %v548
        %vm635 = vcmp.eq.f32.partialorder %v629, %v549
        %vm636 = vcmp.gt.s32.totalorder %v564, 2
        %vm637 = vcmp.gt.s32.totalorder %v565, 2
        %vm638 = vcmp.gt.s32.totalorder %v566, 2
        %v639 = vsel %vm636, 1, 0
        %v640 = vsel %vm637, 1, 0
        %v641 = vsel %vm638, 1, 0
        %vm642 = vcmp.eq.s32.totalorder %v639, 1
        %vm643 = vcmp.eq.s32.totalorder %v640, 1
        %vm644 = vcmp.eq.s32.totalorder %v641, 1
        %vm645 = vmand %vm633, %vm642
        %vm646 = vmand %vm634, %vm643
        %vm647 = vmand %vm635, %vm644
        %vm648 = vmor %vm630, %vm645
        %vm649 = vmor %vm631, %vm646
        %vm650 = vmor %vm632, %vm647
        %v651 = vsel %vm648, 1, 0
        %v652 = vsel %vm649, 1, 0
        %v653 = vsel %vm650, 1, 0
        %v654 = vcvt.s32.f32 %v651
        %v655 = vcvt.s32.f32 %v652
        %v656 = vcvt.s32.f32 %v653
        %v657 = vadd.f32 %v626, %v654
        %v658 = vadd.f32 %v627, %v655
        %v659 = vadd.f32 %v628, %v656
        %v660 = vperm.slane %v547, 3
        %vm661 = vcmp.gt.f32.partialorder %v660, %v547
        %vm662 = vcmp.gt.f32.partialorder %v660, %v548
        %vm663 = vcmp.gt.f32.partialorder %v660, %v549
        %vm664 = vcmp.eq.f32.partialorder %v660, %v547
        %vm665 = vcmp.eq.f32.partialorder %v660, %v548
        %vm666 = vcmp.eq.f32.partialorder %v660, %v549
        %vm667 = vcmp.gt.s32.totalorder %v564, 3
        %vm668 = vcmp.gt.s32.totalorder %v565, 3
        %vm669 = vcmp.gt.s32.totalorder %v566, 3
        %v670 = vsel %vm667, 1, 0
        %v671 = vsel %vm668, 1, 0
        %v672 = vsel %vm669, 1, 0
        %vm673 = vcmp.eq.s32.totalorder %v670, 1
        %vm674 = vcmp.eq.s32.totalorder %v671, 1
        %vm675 = vcmp.eq.s32.totalorder %v672, 1
        %vm676 = vmand %vm664, %vm673
        %vm677 = vmand %vm665, %vm674
        %vm678 = vmand %vm666, %vm675
        %vm679 = vmor %vm661, %vm676
        %vm680 = vmor %vm662, %vm677
        %vm681 = vmor %vm663, %vm678
        %v682 = vsel %vm679, 1, 0
        %v683 = vsel %vm680, 1, 0
        %v684 = vsel %vm681, 1, 0
        %v685 = vcvt.s32.f32 %v682
        %v686 = vcvt.s32.f32 %v683
        %v687 = vcvt.s32.f32 %v684
        %v688 = vadd.f32 %v657, %v685
        %v689 = vadd.f32 %v658, %v686
        %v690 = vadd.f32 %v659, %v687
        %v691 = vperm.slane %v547, 4
        %vm692 = vcmp.gt.f32.partialorder %v691, %v547
        %vm693 = vcmp.gt.f32.partialorder %v691, %v548
        %vm694 = vcmp.gt.f32.partialorder %v691, %v549
        %vm695 = vcmp.eq.f32.partialorder %v691, %v547
        %vm696 = vcmp.eq.f32.partialorder %v691, %v548
        %vm697 = vcmp.eq.f32.partialorder %v691, %v549
        %vm698 = vcmp.gt.s32.totalorder %v564, 4
        %vm699 = vcmp.gt.s32.totalorder %v565, 4
        %vm700 = vcmp.gt.s32.totalorder %v566, 4
        %v701 = vsel %vm698, 1, 0
        %v702 = vsel %vm699, 1, 0
        %v703 = vsel %vm700, 1, 0
        %vm704 = vcmp.eq.s32.totalorder %v701, 1
        %vm705 = vcmp.eq.s32.totalorder %v702, 1
        %vm706 = vcmp.eq.s32.totalorder %v703, 1
        %vm707 = vmand %vm695, %vm704
        %vm708 = vmand %vm696, %vm705
        %vm709 = vmand %vm697, %vm706
        %vm710 = vmor %vm692, %vm707
        %vm711 = vmor %vm693, %vm708
        %vm712 = vmor %vm694, %vm709
        %v713 = vsel %vm710, 1, 0
        %v714 = vsel %vm711, 1, 0
        %v715 = vsel %vm712, 1, 0
        %v716 = vcvt.s32.f32 %v713
        %v717 = vcvt.s32.f32 %v714
        %v718 = vcvt.s32.f32 %v715
        %v719 = vadd.f32 %v688, %v716
        %v720 = vadd.f32 %v689, %v717
        %v721 = vadd.f32 %v690, %v718
        %v722 = vperm.slane %v547, 5
        %vm723 = vcmp.gt.f32.partialorder %v722, %v547
        %vm724 = vcmp.gt.f32.partialorder %v722, %v548
        %vm725 = vcmp.gt.f32.partialorder %v722, %v549
        %vm726 = vcmp.eq.f32.partialorder %v722, %v547
        %vm727 = vcmp.eq.f32.partialorder %v722, %v548
        %vm728 = vcmp.eq.f32.partialorder %v722, %v549
        %vm729 = vcmp.gt.s32.totalorder %v564, 5
        %vm730 = vcmp.gt.s32.totalorder %v565, 5
        %vm731 = vcmp.gt.s32.totalorder %v566, 5
        %v732 = vsel %vm729, 1, 0
        %v733 = vsel %vm730, 1, 0
        %v734 = vsel %vm731, 1, 0
        %vm735 = vcmp.eq.s32.totalorder %v732, 1
        %vm736 = vcmp.eq.s32.totalorder %v733, 1
        %vm737 = vcmp.eq.s32.totalorder %v734, 1
        %vm738 = vmand %vm726, %vm735
        %vm739 = vmand %vm727, %vm736
        %vm740 = vmand %vm728, %vm737
        %vm741 = vmor %vm723, %vm738
        %vm742 = vmor %vm724, %vm739
        %vm743 = vmor %vm725, %vm740
        %v744 = vsel %vm741, 1, 0
        %v745 = vsel %vm742, 1, 0
        %v746 = vsel %vm743, 1, 0
        %v747 = vcvt.s32.f32 %v744
        %v748 = vcvt.s32.f32 %v745
        %v749 = vcvt.s32.f32 %v746
        %v750 = vadd.f32 %v719, %v747
        %v751 = vadd.f32 %v720, %v748
        %v752 = vadd.f32 %v721, %v749
        %v753 = vperm.slane %v547, 6
        %vm754 = vcmp.gt.f32.partialorder %v753, %v547
        %vm755 = vcmp.gt.f32.partialorder %v753, %v548
        %vm756 = vcmp.gt.f32.partialorder %v753, %v549
        %vm757 = vcmp.eq.f32.partialorder %v753, %v547
        %vm758 = vcmp.eq.f32.partialorder %v753, %v548
        %vm759 = vcmp.eq.f32.partialorder %v753, %v549
        %vm760 = vcmp.gt.s32.totalorder %v564, 6
        %vm761 = vcmp.gt.s32.totalorder %v565, 6
        %vm762 = vcmp.gt.s32.totalorder %v566, 6
        %v763 = vsel %vm760, 1, 0
        %v764 = vsel %vm761, 1, 0
        %v765 = vsel %vm762, 1, 0
        %vm766 = vcmp.eq.s32.totalorder %v763, 1
        %vm767 = vcmp.eq.s32.totalorder %v764, 1
        %vm768 = vcmp.eq.s32.totalorder %v765, 1
        %vm769 = vmand %vm757, %vm766
        %vm770 = vmand %vm758, %vm767
        %vm771 = vmand %vm759, %vm768
        %vm772 = vmor %vm754, %vm769
        %vm773 = vmor %vm755, %vm770
        %vm774 = vmor %vm756, %vm771
        %v775 = vsel %vm772, 1, 0
        %v776 = vsel %vm773, 1, 0
        %v777 = vsel %vm774, 1, 0
        %v778 = vcvt.s32.f32 %v775
        %v779 = vcvt.s32.f32 %v776
        %v780 = vcvt.s32.f32 %v777
        %v781 = vadd.f32 %v750, %v778
        %v782 = vadd.f32 %v751, %v779
        %v783 = vadd.f32 %v752, %v780
        %v784 = vperm.slane %v547, 7
        %vm785 = vcmp.gt.f32.partialorder %v784, %v547
        %vm786 = vcmp.gt.f32.partialorder %v784, %v548
        %vm787 = vcmp.gt.f32.partialorder %v784, %v549
        %vm788 = vcmp.eq.f32.partialorder %v784, %v547
        %vm789 = vcmp.eq.f32.partialorder %v784, %v548
        %vm790 = vcmp.eq.f32.partialorder %v784, %v549
        %vm791 = vcmp.gt.s32.totalorder %v564, 7
        %vm792 = vcmp.gt.s32.totalorder %v565, 7
        %vm793 = vcmp.gt.s32.totalorder %v566, 7
        %v794 = vsel %vm791, 1, 0
        %v795 = vsel %vm792, 1, 0
        %v796 = vsel %vm793, 1, 0
        %vm797 = vcmp.eq.s32.totalorder %v794, 1
        %vm798 = vcmp.eq.s32.totalorder %v795, 1
        %vm799 = vcmp.eq.s32.totalorder %v796, 1
        %vm800 = vmand %vm788, %vm797
        %vm801 = vmand %vm789, %vm798
        %vm802 = vmand %vm790, %vm799
        %vm803 = vmor %vm785, %vm800
        %vm804 = vmor %vm786, %vm801
        %vm805 = vmor %vm787, %vm802
        %v806 = vsel %vm803, 1, 0
        %v807 = vsel %vm804, 1, 0
        %v808 = vsel %vm805, 1, 0
        %v809 = vcvt.s32.f32 %v806
        %v810 = vcvt.s32.f32 %v807
        %v811 = vcvt.s32.f32 %v808
        %v812 = vadd.f32 %v781, %v809
        %v813 = vadd.f32 %v782, %v810
        %v814 = vadd.f32 %v783, %v811
        %v815 = vperm.slane %v548, 0
        %vm816 = vcmp.gt.f32.partialorder %v815, %v547
        %vm817 = vcmp.gt.f32.partialorder %v815, %v548
        %vm818 = vcmp.gt.f32.partialorder %v815, %v549
        %vm819 = vcmp.eq.f32.partialorder %v815, %v547
        %vm820 = vcmp.eq.f32.partialorder %v815, %v548
        %vm821 = vcmp.eq.f32.partialorder %v815, %v549
        %vm822 = vcmp.gt.s32.totalorder %v564, 8
        %vm823 = vcmp.gt.s32.totalorder %v565, 8
        %vm824 = vcmp.gt.s32.totalorder %v566, 8
        %v825 = vsel %vm822, 1, 0
        %v826 = vsel %vm823, 1, 0
        %v827 = vsel %vm824, 1, 0
        %vm828 = vcmp.eq.s32.totalorder %v825, 1
        %vm829 = vcmp.eq.s32.totalorder %v826, 1
        %vm830 = vcmp.eq.s32.totalorder %v827, 1
        %vm831 = vmand %vm819, %vm828
        %vm832 = vmand %vm820, %vm829
        %vm833 = vmand %vm821, %vm830
        %vm834 = vmor %vm816, %vm831
        %vm835 = vmor %vm817, %vm832
        %vm836 = vmor %vm818, %vm833
        %v837 = vsel %vm834, 1, 0
        %v838 = vsel %vm835, 1, 0
        %v839 = vsel %vm836, 1, 0
        %v840 = vcvt.s32.f32 %v837
        %v841 = vcvt.s32.f32 %v838
        %v842 = vcvt.s32.f32 %v839
        %v843 = vadd.f32 %v812, %v840
        %v844 = vadd.f32 %v813, %v841
        %v845 = vadd.f32 %v814, %v842
        %v846 = vperm.slane %v548, 1
        %vm847 = vcmp.gt.f32.partialorder %v846, %v547
        %vm848 = vcmp.gt.f32.partialorder %v846, %v548
        %vm849 = vcmp.gt.f32.partialorder %v846, %v549
        %vm850 = vcmp.eq.f32.partialorder %v846, %v547
        %vm851 = vcmp.eq.f32.partialorder %v846, %v548
        %vm852 = vcmp.eq.f32.partialorder %v846, %v549
        %vm853 = vcmp.gt.s32.totalorder %v564, 9
        %vm854 = vcmp.gt.s32.totalorder %v565, 9
        %vm855 = vcmp.gt.s32.totalorder %v566, 9
        %v856 = vsel %vm853, 1, 0
        %v857 = vsel %vm854, 1, 0
        %v858 = vsel %vm855, 1, 0
        %vm859 = vcmp.eq.s32.totalorder %v856, 1
        %vm860 = vcmp.eq.s32.totalorder %v857, 1
        %vm861 = vcmp.eq.s32.totalorder %v858, 1
        %vm862 = vmand %vm850, %vm859
        %vm863 = vmand %vm851, %vm860
        %vm864 = vmand %vm852, %vm861
        %vm865 = vmor %vm847, %vm862
        %vm866 = vmor %vm848, %vm863
        %vm867 = vmor %vm849, %vm864
        %v868 = vsel %vm865, 1, 0
        %v869 = vsel %vm866, 1, 0
        %v870 = vsel %vm867, 1, 0
        %v871 = vcvt.s32.f32 %v868
        %v872 = vcvt.s32.f32 %v869
        %v873 = vcvt.s32.f32 %v870
        %v874 = vadd.f32 %v843, %v871
        %v875 = vadd.f32 %v844, %v872
        %v876 = vadd.f32 %v845, %v873
        %v877 = vperm.slane %v548, 2
        %vm878 = vcmp.gt.f32.partialorder %v877, %v547
        %vm879 = vcmp.gt.f32.partialorder %v877, %v548
        %vm880 = vcmp.gt.f32.partialorder %v877, %v549
        %vm881 = vcmp.eq.f32.partialorder %v877, %v547
        %vm882 = vcmp.eq.f32.partialorder %v877, %v548
        %vm883 = vcmp.eq.f32.partialorder %v877, %v549
        %vm884 = vcmp.gt.s32.totalorder %v564, 10
        %vm885 = vcmp.gt.s32.totalorder %v565, 10
        %vm886 = vcmp.gt.s32.totalorder %v566, 10
        %v887 = vsel %vm884, 1, 0
        %v888 = vsel %vm885, 1, 0
        %v889 = vsel %vm886, 1, 0
        %vm890 = vcmp.eq.s32.totalorder %v887, 1
        %vm891 = vcmp.eq.s32.totalorder %v888, 1
        %vm892 = vcmp.eq.s32.totalorder %v889, 1
        %vm893 = vmand %vm881, %vm890
        %vm894 = vmand %vm882, %vm891
        %vm895 = vmand %vm883, %vm892
        %vm896 = vmor %vm878, %vm893
        %vm897 = vmor %vm879, %vm894
        %vm898 = vmor %vm880, %vm895
        %v899 = vsel %vm896, 1, 0
        %v900 = vsel %vm897, 1, 0
        %v901 = vsel %vm898, 1, 0
        %v902 = vcvt.s32.f32 %v899
        %v903 = vcvt.s32.f32 %v900
        %v904 = vcvt.s32.f32 %v901
        %v905 = vadd.f32 %v874, %v902
        %v906 = vadd.f32 %v875, %v903
        %v907 = vadd.f32 %v876, %v904
        %v908 = vperm.slane %v548, 3
        %vm909 = vcmp.gt.f32.partialorder %v908, %v547
        %vm910 = vcmp.gt.f32.partialorder %v908, %v548
        %vm911 = vcmp.gt.f32.partialorder %v908, %v549
        %vm912 = vcmp.eq.f32.partialorder %v908, %v547
        %vm913 = vcmp.eq.f32.partialorder %v908, %v548
        %vm914 = vcmp.eq.f32.partialorder %v908, %v549
        %vm915 = vcmp.gt.s32.totalorder %v564, 11
        %vm916 = vcmp.gt.s32.totalorder %v565, 11
        %vm917 = vcmp.gt.s32.totalorder %v566, 11
        %v918 = vsel %vm915, 1, 0
        %v919 = vsel %vm916, 1, 0
        %v920 = vsel %vm917, 1, 0
        %vm921 = vcmp.eq.s32.totalorder %v918, 1
        %vm922 = vcmp.eq.s32.totalorder %v919, 1
        %vm923 = vcmp.eq.s32.totalorder %v920, 1
        %vm924 = vmand %vm912, %vm921
        %vm925 = vmand %vm913, %vm922
        %vm926 = vmand %vm914, %vm923
        %vm927 = vmor %vm909, %vm924
        %vm928 = vmor %vm910, %vm925
        %vm929 = vmor %vm911, %vm926
        %v930 = vsel %vm927, 1, 0
        %v931 = vsel %vm928, 1, 0
        %v932 = vsel %vm929, 1, 0
        %v933 = vcvt.s32.f32 %v930
        %v934 = vcvt.s32.f32 %v931
        %v935 = vcvt.s32.f32 %v932
        %v936 = vadd.f32 %v905, %v933
        %v937 = vadd.f32 %v906, %v934
        %v938 = vadd.f32 %v907, %v935
        %v939 = vperm.slane %v548, 4
        %vm940 = vcmp.gt.f32.partialorder %v939, %v547
        %vm941 = vcmp.gt.f32.partialorder %v939, %v548
        %vm942 = vcmp.gt.f32.partialorder %v939, %v549
        %vm943 = vcmp.eq.f32.partialorder %v939, %v547
        %vm944 = vcmp.eq.f32.partialorder %v939, %v548
        %vm945 = vcmp.eq.f32.partialorder %v939, %v549
        %vm946 = vcmp.gt.s32.totalorder %v564, 12
        %vm947 = vcmp.gt.s32.totalorder %v565, 12
        %vm948 = vcmp.gt.s32.totalorder %v566, 12
        %v949 = vsel %vm946, 1, 0
        %v950 = vsel %vm947, 1, 0
        %v951 = vsel %vm948, 1, 0
        %vm952 = vcmp.eq.s32.totalorder %v949, 1
        %vm953 = vcmp.eq.s32.totalorder %v950, 1
        %vm954 = vcmp.eq.s32.totalorder %v951, 1
        %vm955 = vmand %vm943, %vm952
        %vm956 = vmand %vm944, %vm953
        %vm957 = vmand %vm945, %vm954
        %vm958 = vmor %vm940, %vm955
        %vm959 = vmor %vm941, %vm956
        %vm960 = vmor %vm942, %vm957
        %v961 = vsel %vm958, 1, 0
        %v962 = vsel %vm959, 1, 0
        %v963 = vsel %vm960, 1, 0
        %v964 = vcvt.s32.f32 %v961
        %v965 = vcvt.s32.f32 %v962
        %v966 = vcvt.s32.f32 %v963
        %v967 = vadd.f32 %v936, %v964
        %v968 = vadd.f32 %v937, %v965
        %v969 = vadd.f32 %v938, %v966
        %v970 = vperm.slane %v548, 5
        %vm971 = vcmp.gt.f32.partialorder %v970, %v547
        %vm972 = vcmp.gt.f32.partialorder %v970, %v548
        %vm973 = vcmp.gt.f32.partialorder %v970, %v549
        %vm974 = vcmp.eq.f32.partialorder %v970, %v547
        %vm975 = vcmp.eq.f32.partialorder %v970, %v548
        %vm976 = vcmp.eq.f32.partialorder %v970, %v549
        %vm977 = vcmp.gt.s32.totalorder %v564, 13
        %vm978 = vcmp.gt.s32.totalorder %v565, 13
        %vm979 = vcmp.gt.s32.totalorder %v566, 13
        %v980 = vsel %vm977, 1, 0
        %v981 = vsel %vm978, 1, 0
        %v982 = vsel %vm979, 1, 0
        %vm983 = vcmp.eq.s32.totalorder %v980, 1
        %vm984 = vcmp.eq.s32.totalorder %v981, 1
        %vm985 = vcmp.eq.s32.totalorder %v982, 1
        %vm986 = vmand %vm974, %vm983
        %vm987 = vmand %vm975, %vm984
        %vm988 = vmand %vm976, %vm985
        %vm989 = vmor %vm971, %vm986
        %vm990 = vmor %vm972, %vm987
        %vm991 = vmor %vm973, %vm988
        %v992 = vsel %vm989, 1, 0
        %v993 = vsel %vm990, 1, 0
        %v994 = vsel %vm991, 1, 0
        %v995 = vcvt.s32.f32 %v992
        %v996 = vcvt.s32.f32 %v993
        %v997 = vcvt.s32.f32 %v994
        %v998 = vadd.f32 %v967, %v995
        %v999 = vadd.f32 %v968, %v996
        %v1000 = vadd.f32 %v969, %v997
        %v1001 = vperm.slane %v548, 6
        %vm1002 = vcmp.gt.f32.partialorder %v1001, %v547
        %vm1003 = vcmp.gt.f32.partialorder %v1001, %v548
        %vm1004 = vcmp.gt.f32.partialorder %v1001, %v549
        %vm1005 = vcmp.eq.f32.partialorder %v1001, %v547
        %vm1006 = vcmp.eq.f32.partialorder %v1001, %v548
        %vm1007 = vcmp.eq.f32.partialorder %v1001, %v549
        %vm1008 = vcmp.gt.s32.totalorder %v564, 14
        %vm1009 = vcmp.gt.s32.totalorder %v565, 14
        %vm1010 = vcmp.gt.s32.totalorder %v566, 14
        %v1011 = vsel %vm1008, 1, 0
        %v1012 = vsel %vm1009, 1, 0
        %v1013 = vsel %vm1010, 1, 0
        %vm1014 = vcmp.eq.s32.totalorder %v1011, 1
        %vm1015 = vcmp.eq.s32.totalorder %v1012, 1
        %vm1016 = vcmp.eq.s32.totalorder %v1013, 1
        %vm1017 = vmand %vm1005, %vm1014
        %vm1018 = vmand %vm1006, %vm1015
        %vm1019 = vmand %vm1007, %vm1016
        %vm1020 = vmor %vm1002, %vm1017
        %vm1021 = vmor %vm1003, %vm1018
        %vm1022 = vmor %vm1004, %vm1019
        %v1023 = vsel %vm1020, 1, 0
        %v1024 = vsel %vm1021, 1, 0
        %v1025 = vsel %vm1022, 1, 0
        %v1026 = vcvt.s32.f32 %v1023
        %v1027 = vcvt.s32.f32 %v1024
        %v1028 = vcvt.s32.f32 %v1025
        %v1029 = vadd.f32 %v998, %v1026
        %v1030 = vadd.f32 %v999, %v1027
        %v1031 = vadd.f32 %v1000, %v1028
        %v1032 = vperm.slane %v548, 7
        %vm1033 = vcmp.gt.f32.partialorder %v1032, %v547
        %vm1034 = vcmp.gt.f32.partialorder %v1032, %v548
        %vm1035 = vcmp.gt.f32.partialorder %v1032, %v549
        %vm1036 = vcmp.eq.f32.partialorder %v1032, %v547
        %vm1037 = vcmp.eq.f32.partialorder %v1032, %v548
        %vm1038 = vcmp.eq.f32.partialorder %v1032, %v549
        %vm1039 = vcmp.gt.s32.totalorder %v564, 15
        %vm1040 = vcmp.gt.s32.totalorder %v565, 15
        %vm1041 = vcmp.gt.s32.totalorder %v566, 15
        %v1042 = vsel %vm1039, 1, 0
        %v1043 = vsel %vm1040, 1, 0
        %v1044 = vsel %vm1041, 1, 0
        %vm1045 = vcmp.eq.s32.totalorder %v1042, 1
        %vm1046 = vcmp.eq.s32.totalorder %v1043, 1
        %vm1047 = vcmp.eq.s32.totalorder %v1044, 1
        %vm1048 = vmand %vm1036, %vm1045
        %vm1049 = vmand %vm1037, %vm1046
        %vm1050 = vmand %vm1038, %vm1047
        %vm1051 = vmor %vm1033, %vm1048
        %vm1052 = vmor %vm1034, %vm1049
        %vm1053 = vmor %vm1035, %vm1050
        %v1054 = vsel %vm1051, 1, 0
        %v1055 = vsel %vm1052, 1, 0
        %v1056 = vsel %vm1053, 1, 0
        %v1057 = vcvt.s32.f32 %v1054
        %v1058 = vcvt.s32.f32 %v1055
        %v1059 = vcvt.s32.f32 %v1056
        %v1060 = vadd.f32 %v1029, %v1057
        %v1061 = vadd.f32 %v1030, %v1058
        %v1062 = vadd.f32 %v1031, %v1059
        %v1063 = vperm.slane %v549, 0
        %vm1064 = vcmp.gt.f32.partialorder %v1063, %v547
        %vm1065 = vcmp.gt.f32.partialorder %v1063, %v548
        %vm1066 = vcmp.gt.f32.partialorder %v1063, %v549
        %vm1067 = vcmp.eq.f32.partialorder %v1063, %v547
        %vm1068 = vcmp.eq.f32.partialorder %v1063, %v548
        %vm1069 = vcmp.eq.f32.partialorder %v1063, %v549
        %vm1070 = vcmp.gt.s32.totalorder %v564, 16
        %vm1071 = vcmp.gt.s32.totalorder %v565, 16
        %vm1072 = vcmp.gt.s32.totalorder %v566, 16
        %v1073 = vsel %vm1070, 1, 0
        %v1074 = vsel %vm1071, 1, 0
        %v1075 = vsel %vm1072, 1, 0
        %vm1076 = vcmp.eq.s32.totalorder %v1073, 1
        %vm1077 = vcmp.eq.s32.totalorder %v1074, 1
        %vm1078 = vcmp.eq.s32.totalorder %v1075, 1
        %vm1079 = vmand %vm1067, %vm1076
        %vm1080 = vmand %vm1068, %vm1077
        %vm1081 = vmand %vm1069, %vm1078
        %vm1082 = vmor %vm1064, %vm1079
        %vm1083 = vmor %vm1065, %vm1080
        %vm1084 = vmor %vm1066, %vm1081
        %v1085 = vsel %vm1082, 1, 0
        %v1086 = vsel %vm1083, 1, 0
        %v1087 = vsel %vm1084, 1, 0
        %v1088 = vcvt.s32.f32 %v1085
        %v1089 = vcvt.s32.f32 %v1086
        %v1090 = vcvt.s32.f32 %v1087
        %v1091 = vadd.f32 %v1060, %v1088
        %v1092 = vadd.f32 %v1061, %v1089
        %v1093 = vadd.f32 %v1062, %v1090
        %v1094 = vperm.slane %v549, 1
        %vm1095 = vcmp.gt.f32.partialorder %v1094, %v547
        %vm1096 = vcmp.gt.f32.partialorder %v1094, %v548
        %vm1097 = vcmp.gt.f32.partialorder %v1094, %v549
        %vm1098 = vcmp.eq.f32.partialorder %v1094, %v547
        %vm1099 = vcmp.eq.f32.partialorder %v1094, %v548
        %vm1100 = vcmp.eq.f32.partialorder %v1094, %v549
        %vm1101 = vcmp.gt.s32.totalorder %v564, 17
        %vm1102 = vcmp.gt.s32.totalorder %v565, 17
        %vm1103 = vcmp.gt.s32.totalorder %v566, 17
        %v1104 = vsel %vm1101, 1, 0
        %v1105 = vsel %vm1102, 1, 0
        %v1106 = vsel %vm1103, 1, 0
        %vm1107 = vcmp.eq.s32.totalorder %v1104, 1
        %vm1108 = vcmp.eq.s32.totalorder %v1105, 1
        %vm1109 = vcmp.eq.s32.totalorder %v1106, 1
        %vm1110 = vmand %vm1098, %vm1107
        %vm1111 = vmand %vm1099, %vm1108
        %vm1112 = vmand %vm1100, %vm1109
        %vm1113 = vmor %vm1095, %vm1110
        %vm1114 = vmor %vm1096, %vm1111
        %vm1115 = vmor %vm1097, %vm1112
        %v1116 = vsel %vm1113, 1, 0
        %v1117 = vsel %vm1114, 1, 0
        %v1118 = vsel %vm1115, 1, 0
        %v1119 = vcvt.s32.f32 %v1116
        %v1120 = vcvt.s32.f32 %v1117
        %v1121 = vcvt.s32.f32 %v1118
        %v1122 = vadd.f32 %v1091, %v1119
        %v1123 = vadd.f32 %v1092, %v1120
        %v1124 = vadd.f32 %v1093, %v1121
        %v1125 = vperm.slane %v549, 2
        %vm1126 = vcmp.gt.f32.partialorder %v1125, %v547
        %vm1127 = vcmp.gt.f32.partialorder %v1125, %v548
        %vm1128 = vcmp.gt.f32.partialorder %v1125, %v549
        %vm1129 = vcmp.eq.f32.partialorder %v1125, %v547
        %vm1130 = vcmp.eq.f32.partialorder %v1125, %v548
        %vm1131 = vcmp.eq.f32.partialorder %v1125, %v549
        %vm1132 = vcmp.gt.s32.totalorder %v564, 18
        %vm1133 = vcmp.gt.s32.totalorder %v565, 18
        %vm1134 = vcmp.gt.s32.totalorder %v566, 18
        %v1135 = vsel %vm1132, 1, 0
        %v1136 = vsel %vm1133, 1, 0
        %v1137 = vsel %vm1134, 1, 0
        %vm1138 = vcmp.eq.s32.totalorder %v1135, 1
        %vm1139 = vcmp.eq.s32.totalorder %v1136, 1
        %vm1140 = vcmp.eq.s32.totalorder %v1137, 1
        %vm1141 = vmand %vm1129, %vm1138
        %vm1142 = vmand %vm1130, %vm1139
        %vm1143 = vmand %vm1131, %vm1140
        %vm1144 = vmor %vm1126, %vm1141
        %vm1145 = vmor %vm1127, %vm1142
        %vm1146 = vmor %vm1128, %vm1143
        %v1147 = vsel %vm1144, 1, 0
        %v1148 = vsel %vm1145, 1, 0
        %v1149 = vsel %vm1146, 1, 0
        %v1150 = vcvt.s32.f32 %v1147
        %v1151 = vcvt.s32.f32 %v1148
        %v1152 = vcvt.s32.f32 %v1149
        %v1153 = vadd.f32 %v1122, %v1150
        %v1154 = vadd.f32 %v1123, %v1151
        %v1155 = vadd.f32 %v1124, %v1152
        %v1156 = vperm.slane %v549, 3
        %vm1157 = vcmp.gt.f32.partialorder %v1156, %v547
        %vm1158 = vcmp.gt.f32.partialorder %v1156, %v548
        %vm1159 = vcmp.gt.f32.partialorder %v1156, %v549
        %vm1160 = vcmp.eq.f32.partialorder %v1156, %v547
        %vm1161 = vcmp.eq.f32.partialorder %v1156, %v548
        %vm1162 = vcmp.eq.f32.partialorder %v1156, %v549
        %vm1163 = vcmp.gt.s32.totalorder %v564, 19
        %vm1164 = vcmp.gt.s32.totalorder %v565, 19
        %vm1165 = vcmp.gt.s32.totalorder %v566, 19
        %v1166 = vsel %vm1163, 1, 0
        %v1167 = vsel %vm1164, 1, 0
        %v1168 = vsel %vm1165, 1, 0
        %vm1169 = vcmp.eq.s32.totalorder %v1166, 1
        %vm1170 = vcmp.eq.s32.totalorder %v1167, 1
        %vm1171 = vcmp.eq.s32.totalorder %v1168, 1
        %vm1172 = vmand %vm1160, %vm1169
        %vm1173 = vmand %vm1161, %vm1170
        %vm1174 = vmand %vm1162, %vm1171
        %vm1175 = vmor %vm1157, %vm1172
        %vm1176 = vmor %vm1158, %vm1173
        %vm1177 = vmor %vm1159, %vm1174
        %v1178 = vsel %vm1175, 1, 0
        %v1179 = vsel %vm1176, 1, 0
        %v1180 = vsel %vm1177, 1, 0
        %v1181 = vcvt.s32.f32 %v1178
        %v1182 = vcvt.s32.f32 %v1179
        %v1183 = vcvt.s32.f32 %v1180
        %v1184 = vadd.f32 %v1153, %v1181
        %v1185 = vadd.f32 %v1154, %v1182
        %v1186 = vadd.f32 %v1155, %v1183
        %v1187 = vperm.slane %v549, 4
        %vm1188 = vcmp.gt.f32.partialorder %v1187, %v547
        %vm1189 = vcmp.gt.f32.partialorder %v1187, %v548
        %vm1190 = vcmp.gt.f32.partialorder %v1187, %v549
        %vm1191 = vcmp.eq.f32.partialorder %v1187, %v547
        %vm1192 = vcmp.eq.f32.partialorder %v1187, %v548
        %vm1193 = vcmp.eq.f32.partialorder %v1187, %v549
        %vm1194 = vcmp.gt.s32.totalorder %v564, 20
        %vm1195 = vcmp.gt.s32.totalorder %v565, 20
        %vm1196 = vcmp.gt.s32.totalorder %v566, 20
        %v1197 = vsel %vm1194, 1, 0
        %v1198 = vsel %vm1195, 1, 0
        %v1199 = vsel %vm1196, 1, 0
        %vm1200 = vcmp.eq.s32.totalorder %v1197, 1
        %vm1201 = vcmp.eq.s32.totalorder %v1198, 1
        %vm1202 = vcmp.eq.s32.totalorder %v1199, 1
        %vm1203 = vmand %vm1191, %vm1200
        %vm1204 = vmand %vm1192, %vm1201
        %vm1205 = vmand %vm1193, %vm1202
        %vm1206 = vmor %vm1188, %vm1203
        %vm1207 = vmor %vm1189, %vm1204
        %vm1208 = vmor %vm1190, %vm1205
        %v1209 = vsel %vm1206, 1, 0
        %v1210 = vsel %vm1207, 1, 0
        %v1211 = vsel %vm1208, 1, 0
        %v1212 = vcvt.s32.f32 %v1209
        %v1213 = vcvt.s32.f32 %v1210
        %v1214 = vcvt.s32.f32 %v1211
        %v1215 = vadd.f32 %v1184, %v1212
        %v1216 = vadd.f32 %v1185, %v1213
        %v1217 = vadd.f32 %v1186, %v1214
        %v1218 = vperm.slane %v549, 5
        %vm1219 = vcmp.gt.f32.partialorder %v1218, %v547
        %vm1220 = vcmp.gt.f32.partialorder %v1218, %v548
        %vm1221 = vcmp.gt.f32.partialorder %v1218, %v549
        %vm1222 = vcmp.eq.f32.partialorder %v1218, %v547
        %vm1223 = vcmp.eq.f32.partialorder %v1218, %v548
        %vm1224 = vcmp.eq.f32.partialorder %v1218, %v549
        %vm1225 = vcmp.gt.s32.totalorder %v564, 21
        %vm1226 = vcmp.gt.s32.totalorder %v565, 21
        %vm1227 = vcmp.gt.s32.totalorder %v566, 21
        %v1228 = vsel %vm1225, 1, 0
        %v1229 = vsel %vm1226, 1, 0
        %v1230 = vsel %vm1227, 1, 0
        %vm1231 = vcmp.eq.s32.totalorder %v1228, 1
        %vm1232 = vcmp.eq.s32.totalorder %v1229, 1
        %vm1233 = vcmp.eq.s32.totalorder %v1230, 1
        %vm1234 = vmand %vm1222, %vm1231
        %vm1235 = vmand %vm1223, %vm1232
        %vm1236 = vmand %vm1224, %vm1233
        %vm1237 = vmor %vm1219, %vm1234
        %vm1238 = vmor %vm1220, %vm1235
        %vm1239 = vmor %vm1221, %vm1236
        %v1240 = vsel %vm1237, 1, 0
        %v1241 = vsel %vm1238, 1, 0
        %v1242 = vsel %vm1239, 1, 0
        %v1243 = vcvt.s32.f32 %v1240
        %v1244 = vcvt.s32.f32 %v1241
        %v1245 = vcvt.s32.f32 %v1242
        %v1246 = vadd.f32 %v1215, %v1243
        %v1247 = vadd.f32 %v1216, %v1244
        %v1248 = vadd.f32 %v1217, %v1245
        %vm1249 = vcmp.lt.f32.partialorder %v1246, 8.0
        %vm1250 = vcmp.lt.f32.partialorder %v1247, 8.0
        %vm1251 = vcmp.lt.f32.partialorder %v1248, 8.0
        %v1252 = vsel %vm1249, %v547, 0.0
        %v1253 = vsel %vm1250, %v548, 0.0
        %v1254 = vsel %vm1251, %v549, 0.0
        %1255 = vst [vmem:[%s271] sm:$0xff] %v1252
        %1256 = vst [vmem:[%s271 + $0x8] sm:$0xff] %v1253
        %1257 = vst [vmem:[%s271 + $0x10] sm:$0x3f] %v1254
        %p1258 = scmp.lt.s32.totalorder %s23, 1
        %s1259 = scalar_select %p1258, %s23, 1
        %p1260 = scmp.lt.s32.totalorder %s24, 0
        %s1261 = scalar_select %p1260, %s24, 0
        %s1262 = smul.addr %s1259, 3
        %s1263 = sadd.s32 %s1261, %s1262
        %s1264 = smul.addr %s1263, 8
        %s1265 = scalar_lea.vmem %s5, %s1264
        // Predicated region
        $region45: #{tpu_custom_call.1} parent=39 // pred_check
          %p1266 = pneg %p163
        $region46: #{tpu_custom_call.1} parent=39 // pred_check_branch
          %1268 = sbr.rel (%p1266) target = $region48
        $region47: #{tpu_custom_call.1} parent=39 // pred_region
          _
        $region48: #{tpu_custom_call.1} parent=39 // pred_fallthru
          _
      $region40: #{tpu_custom_call.1} parent=5 // pred_fallthru
        _
      %p1269 = scmp.le.s32.totalorder 2, %s14
      // Predicated region
      $region49: #{tpu_custom_call.1} parent=5 // pred_check
        %p1270 = pneg %p1269
      $region50: #{tpu_custom_call.1} parent=5 // pred_check_branch
        %1272 = sbr.rel (%p1270) target = $region52
      $region51: #{tpu_custom_call.1} parent=5 // pred_region
        %s1273 = ssub.s32 %s14, 2
        // Predicated region
        $region53: #{tpu_custom_call.1} parent=51 // pred_check
          %p1274 = pneg %p169
        $region54: #{tpu_custom_call.1} parent=51 // pred_check_branch
          %1276 = sbr.rel (%p1274) target = $region56
        $region55: #{tpu_custom_call.1} parent=51 // pred_region
          %p1277 = scmp.lt.s32.totalorder %s25, 1
          %s1278 = scalar_select %p1277, %s25, 1
          %p1279 = scmp.lt.s32.totalorder %s26, 0
          %s1280 = scalar_select %p1279, %s26, 0
          %s1281 = smul.addr %s1278, 3
          %s1282 = sadd.s32 %s1280, %s1281
          %s1283 = smul.addr %s1282, 8
          %s1284 = scalar_lea.vmem %s5, %s1283
        $region56: #{tpu_custom_call.1} parent=51 // pred_fallthru
          _
      $region52: #{tpu_custom_call.1} parent=5 // pred_fallthru
        _
    $region6: #{tpu_custom_call.1} parent=1 // loop_footer
      %s18 = sadd.s32 1, %s14
    $region7: #{tpu_custom_call.1} parent=1 // loop_footer_branch
      %13 = sbr.rel target = $region3
    $region8: #{tpu_custom_call.1} parent=1 // loop_exit
      _
    %1285 = vsyncpa [#allocation3], 1
    %s1286 = scalar_lea.sflag [#allocation3], 1
    %1287 = vsyncpa %s1286, 1

</llo_original>
